<compile_context>
chip_gen: v6e
topology: v6e:2x2x1
jax: 0.10.0
libtpu: 0.0.40
codegen_flags: <defaults>
</compile_context>

<pallas_src>
import functools

import jax
import jax.numpy as jnp
from jax.experimental import pallas as pl
from jax.experimental.pallas import tpu as pltpu

N_EMBD = 32
NUM_HEADS = 4
HEAD_SIZE = N_EMBD // NUM_HEADS  # 8


def _mha_kernel(x_ref, wqkv_ref, wp_ref, bp_ref, o_ref, *, num_heads):
    # x_ref:    (T, C)    one batch element's tokens (leading batch dim squeezed)
    # wqkv_ref: (C, 3C)   packed [Wq | Wk | Wv], head-major columns
    # wp_ref:   (C, C)    output projection (in_features, out_features)
    # bp_ref:   (1, C)
    # o_ref:    (T, C)
    T, C = x_ref.shape
    H = num_heads
    D = C // H

    x = x_ref[...]
    wqkv = wqkv_ref[...]
    wp = wp_ref[...]

    # Fused QKV projection: one lane-dense (T, C) x (C, 3C) MXU matmul.
    qkv = jnp.dot(x, wqkv, preferred_element_type=jnp.float32)        # (T, 3C)

    # NB: the PyTorch module scales by the FULL embedding dim C, not head_size.
    # This is intentional (matches the spec) even though it is non-standard.
    scale = jnp.float32(C) ** -0.5

    # In-kernel additive causal mask: 0 on/below the diagonal, -1e30 above.
    # (-1e30, not -inf: every row has the diagonal unmasked, so max-subtraction
    #  stays finite and masked entries underflow to exactly 0 after exp.)
    row = jax.lax.broadcasted_iota(jnp.int32, (T, T), 0)
    col = jax.lax.broadcasted_iota(jnp.int32, (T, T), 1)
    causal_add = jnp.where(row >= col, jnp.float32(0.0), jnp.float32(-1e30))

    # Bias folded into the accumulator init (saves a separate VPU add pass).
    y = jnp.broadcast_to(bp_ref[...].astype(jnp.float32), (T, C))

    for h in range(H):                       # static, fully unrolled (H = 4)
        q = qkv[:, h * D:(h + 1) * D] * scale            # (T, D), scale folded in
        k = qkv[:, C + h * D:C + (h + 1) * D]            # (T, D)
        v = qkv[:, 2 * C + h * D:2 * C + (h + 1) * D]    # (T, D)

        # scores = q @ k^T (contract last dims; no explicit transpose).
        s = jax.lax.dot_general(q, k, (((1,), (1,)), ((), ())),
                                preferred_element_type=jnp.float32)   # (T, T)
        s = s + causal_add                                # causal mask

        m = jnp.max(s, axis=-1, keepdims=True)
        p = jnp.exp(s - m)
        denom = jnp.sum(p, axis=-1, keepdims=True)
        p = p * pl.reciprocal(denom, approx=True)         # EUP reciprocal

        out_h = jnp.dot(p, v, preferred_element_type=jnp.float32)     # (T, D)

        # Head-concat folded into the projection: head h hits rows
        # [h*D, (h+1)*D) of W_proj; accumulate per-head contributions.
        y = y + jnp.dot(out_h, wp[h * D:(h + 1) * D, :],
                        preferred_element_type=jnp.float32)           # (T, C)

    # (attention-weight dropout and output dropout are identity in eval mode)
    o_ref[...] = y.astype(o_ref.dtype)


def pack_qkv_weights(wq, wk, wv):
    """One-time setup: pack per-head (H, C, D) Q/K/V weights into (C, 3C).

    Hoisted out of the per-call forward so the 3 relayouts + concat do not run
    as separate XLA ops on every call.
    """
    H, C, D = wq.shape

    def head_major(w):                       # (H, C, D) -> (C, H*D)
        return jnp.transpose(w, (1, 0, 2)).reshape(C, H * D)

    return jnp.concatenate(
        [head_major(wq), head_major(wk), head_major(wv)], axis=1)     # (C, 3C)


@functools.partial(jax.jit, static_argnames=("num_heads",))
def multi_head_attention(x, w_qkv, wp, bp, *, num_heads=NUM_HEADS):
    """x: (B, T, C); w_qkv: (C, 3C) prepacked; wp: (C, C) = torch_weight.T; bp: (1, C)."""
    B, T, C = x.shape
    H = num_heads
    D = C // H

    # Advisory cost estimate for the surrounding XLA schedule (no mask input).
    flops = B * (2 * T * C * 3 * C              # fused QKV projection
                 + H * 2 * T * T * D            # scores
                 + H * 2 * T * T * D            # attn @ V
                 + 2 * T * C * C)               # output projection
    transcendentals = B * H * T * T             # exp
    bytes_accessed = 4 * (2 * B * T * C         # x in + out
                          + C * 3 * C           # packed Wqkv
                          + C * C + C)          # Wproj + bias

    out = pl.pallas_call(
        functools.partial(_mha_kernel, num_heads=H),
        out_shape=jax.ShapeDtypeStruct((B, T, C), x.dtype),
        grid_spec=pltpu.PrefetchScalarGridSpec(
            num_scalar_prefetch=0,
            grid=(B,),                                          # one step per batch element
            in_specs=[
                pl.BlockSpec((None, T, C), lambda b: (b, 0, 0)),   # token slab (squeezed)
                pl.BlockSpec((C, 3 * C), lambda b: (0, 0)),        # packed Wqkv
                pl.BlockSpec((C, C), lambda b: (0, 0)),            # Wproj^T
                pl.BlockSpec((1, C), lambda b: (0, 0)),            # bias
            ],
            out_specs=pl.BlockSpec((None, T, C), lambda b: (b, 0, 0)),
        ),
        compiler_params=pltpu.CompilerParams(
            dimension_semantics=("parallel",)),                 # shards over both v7x TCs
        cost_estimate=pl.CostEstimate(
            flops=int(flops),
            transcendentals=int(transcendentals),
            bytes_accessed=int(bytes_accessed)),
    )(x, w_qkv, wp, bp)

    return out


def _reference(x, wq, wk, wv, wp, bp):
    """Pure-JAX reference mirroring the PyTorch forward (dropout = identity)."""
    B, T, C = x.shape
    q = jnp.einsum('btc,hcd->bhtd', x, wq)
    k = jnp.einsum('btc,hcd->bhtd', x, wk)
    v = jnp.einsum('btc,hcd->bhtd', x, wv)
    wei = jnp.einsum('bhtd,bhsd->bhts', q, k) * (C ** -0.5)
    mask = jnp.tril(jnp.ones((T, T), bool))
    wei = jnp.where(mask[None, None], wei, -jnp.inf)
    wei = jax.nn.softmax(wei, axis=-1)
    out = jnp.einsum('bhts,bhsd->bhtd', wei, v)
    out = jnp.transpose(out, (0, 2, 1, 3)).reshape(B, T, C)
    return out @ wp + bp[0]


if __name__ == "__main__":
    B, T, C, H, D = 2, 8, N_EMBD, NUM_HEADS, HEAD_SIZE

    key = jax.random.PRNGKey(0)
    kx, kq, kk, kv, kp, kb = jax.random.split(key, 6)

    x = jax.random.normal(kx, (B, T, C), jnp.float32)
    # Deterministic parameter init (Linear weights stored pre-transposed).
    wq = jax.random.normal(kq, (H, C, D), jnp.float32) * 0.1
    wk = jax.random.normal(kk, (H, C, D), jnp.float32) * 0.1
    wv = jax.random.normal(kv, (H, C, D), jnp.float32) * 0.1
    wp = jax.random.normal(kp, (C, C), jnp.float32) * 0.1
    bp = jax.random.normal(kb, (1, C), jnp.float32) * 0.1

    # One-time weight packing (setup, not per-forward).
    w_qkv = jax.block_until_ready(pack_qkv_weights(wq, wk, wv))

    out = multi_head_attention(x, w_qkv, wp, bp, num_heads=H)
    jax.block_until_ready(out)

    ref = _reference(x, wq, wk, wv, wp, bp)
    # Tolerance 1e-3 because of the approximate EUP reciprocal in the softmax
    # normalization (error ~2e-4 relative); acceptable for inference.
    assert jnp.allclose(out, ref, atol=1e-3, rtol=1e-3), "mismatch vs reference"

    print("KERNEL_OK")
</pallas_src>

<mosaic_0001>
module attributes {stable_mosaic.version = 11 : i64} {
  func.func @_mha_kernel(%arg0: i32, %arg1: memref<1x8x32xf32, #tpu.memory_space<vmem>>, %arg2: memref<32x96xf32, #tpu.memory_space<vmem>>, %arg3: memref<32x32xf32, #tpu.memory_space<vmem>>, %arg4: memref<1x32xf32, #tpu.memory_space<vmem>>, %arg5: memref<1x8x32xf32, #tpu.memory_space<vmem>>) attributes {dimension_semantics = [#tpu.dimension_semantics<parallel>], iteration_bounds = array<i64: 2>, scalar_prefetch = 0 : i64, scratch_operands = 0 : i64, tpu.core_type = #tpu.core_type<tc>, window_params = [{transform_indices = @transform_0, window_bounds = array<i64: 1, 8, 32>}, {pipeline_mode = #tpu.pipeline_mode<synchronous>, transform_indices = @transform_1, window_bounds = array<i64: 32, 96>}, {pipeline_mode = #tpu.pipeline_mode<synchronous>, transform_indices = @transform_2, window_bounds = array<i64: 32, 32>}, {pipeline_mode = #tpu.pipeline_mode<synchronous>, transform_indices = @transform_3, window_bounds = array<i64: 1, 32>}, {transform_indices = @transform_4, window_bounds = array<i64: 1, 8, 32>}]} {
    %c0 = arith.constant 0 : index
    %c0_0 = arith.constant 0 : index
    %c0_1 = arith.constant 0 : index
    %0 = vector.load %arg1[%c0, %c0_0, %c0_1] : memref<1x8x32xf32, #tpu.memory_space<vmem>>, vector<1x8x32xf32>
    %1 = vector.shape_cast %0 : vector<1x8x32xf32> to vector<8x32xf32>
    %c0_2 = arith.constant 0 : index
    %c0_3 = arith.constant 0 : index
    %2 = vector.load %arg2[%c0_2, %c0_3] : memref<32x96xf32, #tpu.memory_space<vmem>>, vector<32x96xf32>
    %c0_4 = arith.constant 0 : index
    %c0_5 = arith.constant 0 : index
    %3 = vector.load %arg3[%c0_4, %c0_5] : memref<32x32xf32, #tpu.memory_space<vmem>>, vector<32x32xf32>
    %cst = arith.constant dense<0.000000e+00> : vector<8x96xf32>
    %4 = tpu.matmul %1, %2, %cst {dimension_numbers = #tpu.dot_dimension_numbers<[1], [0], [0], [1], [0, 0, 1, 1], [], []>} : vector<8x32xf32>, vector<32x96xf32>, vector<8x96xf32> -> vector<8x96xf32>
    %cst_6 = arith.constant 3.200000e+01 : f32
    %cst_7 = arith.constant -5.000000e-01 : f32
    %5 = math.powf %cst_6, %cst_7 : f32
    %6 = tpu.iota {dimensions = array<i32: 0>} : vector<8x8xi32>
    %7 = tpu.iota {dimensions = array<i32: 1>} : vector<8x8xi32>
    %8 = arith.cmpi sge, %6, %7 : vector<8x8xi32>
    %cst_8 = arith.constant 0.000000e+00 : f32
    %cst_9 = arith.constant -1.000000e+30 : f32
    %9 = vector.broadcast %cst_8 : f32 to vector<8x8xf32>
    %10 = vector.broadcast %cst_9 : f32 to vector<8x8xf32>
    %11 = arith.select %8, %9, %10 : vector<8x8xi1>, vector<8x8xf32>
    %c0_10 = arith.constant 0 : index
    %c0_11 = arith.constant 0 : index
    %12 = vector.load %arg4[%c0_10, %c0_11] : memref<1x32xf32, #tpu.memory_space<vmem>>, vector<1x32xf32>
    %13 = vector.shape_cast %12 : vector<1x32xf32> to vector<1x32xf32>
    %14 = vector.broadcast %13 : vector<1x32xf32> to vector<8x32xf32>
    %15 = vector.extract_strided_slice %4 {offsets = [0, 0], sizes = [8, 8], strides = [1, 1]} : vector<8x96xf32> to vector<8x8xf32>
    %16 = vector.broadcast %5 : f32 to vector<8x8xf32>
    %17 = arith.mulf %15, %16 : vector<8x8xf32>
    %18 = vector.extract_strided_slice %4 {offsets = [0, 32], sizes = [8, 8], strides = [1, 1]} : vector<8x96xf32> to vector<8x8xf32>
    %19 = vector.extract_strided_slice %4 {offsets = [0, 64], sizes = [8, 8], strides = [1, 1]} : vector<8x96xf32> to vector<8x8xf32>
    %cst_12 = arith.constant dense<0.000000e+00> : vector<8x8xf32>
    %20 = tpu.matmul %17, %18, %cst_12 {dimension_numbers = #tpu.dot_dimension_numbers<[1], [1], [0], [0], [0, 0, 1, 0], [], []>} : vector<8x8xf32>, vector<8x8xf32>, vector<8x8xf32> -> vector<8x8xf32>
    %21 = arith.addf %20, %11 : vector<8x8xf32>
    %cst_13 = arith.constant dense<0xFF800000> : vector<8xf32>
    %22 = vector.multi_reduction <maximumf>, %21, %cst_13 [1] : vector<8x8xf32> to vector<8xf32>
    %23 = vector.shape_cast %22 : vector<8xf32> to vector<8x1xf32>
    %24 = vector.broadcast %23 : vector<8x1xf32> to vector<8x8xf32>
    %25 = arith.subf %21, %24 : vector<8x8xf32>
    %26 = math.exp %25 : vector<8x8xf32>
    %cst_14 = arith.constant dense<0.000000e+00> : vector<8xf32>
    %27 = vector.multi_reduction <add>, %26, %cst_14 [1] : vector<8x8xf32> to vector<8xf32>
    %28 = vector.shape_cast %27 : vector<8xf32> to vector<8x1xf32>
    %29 = tpu.reciprocal %28 {approx = true} : vector<8x1xf32> -> vector<8x1xf32>
    %30 = vector.broadcast %29 : vector<8x1xf32> to vector<8x8xf32>
    %31 = arith.mulf %26, %30 : vector<8x8xf32>
    %cst_15 = arith.constant dense<0.000000e+00> : vector<8x8xf32>
    %32 = tpu.matmul %31, %19, %cst_15 {dimension_numbers = #tpu.dot_dimension_numbers<[1], [0], [0], [1], [0, 0, 1, 1], [], []>} : vector<8x8xf32>, vector<8x8xf32>, vector<8x8xf32> -> vector<8x8xf32>
    %33 = vector.extract_strided_slice %3 {offsets = [0, 0], sizes = [8, 32], strides = [1, 1]} : vector<32x32xf32> to vector<8x32xf32>
    %cst_16 = arith.constant dense<0.000000e+00> : vector<8x32xf32>
    %34 = tpu.matmul %32, %33, %cst_16 {dimension_numbers = #tpu.dot_dimension_numbers<[1], [0], [0], [1], [0, 0, 1, 1], [], []>} : vector<8x8xf32>, vector<8x32xf32>, vector<8x32xf32> -> vector<8x32xf32>
    %35 = arith.addf %14, %34 : vector<8x32xf32>
    %36 = vector.extract_strided_slice %4 {offsets = [0, 8], sizes = [8, 8], strides = [1, 1]} : vector<8x96xf32> to vector<8x8xf32>
    %37 = vector.broadcast %5 : f32 to vector<8x8xf32>
    %38 = arith.mulf %36, %37 : vector<8x8xf32>
    %39 = vector.extract_strided_slice %4 {offsets = [0, 40], sizes = [8, 8], strides = [1, 1]} : vector<8x96xf32> to vector<8x8xf32>
    %40 = vector.extract_strided_slice %4 {offsets = [0, 72], sizes = [8, 8], strides = [1, 1]} : vector<8x96xf32> to vector<8x8xf32>
    %cst_17 = arith.constant dense<0.000000e+00> : vector<8x8xf32>
    %41 = tpu.matmul %38, %39, %cst_17 {dimension_numbers = #tpu.dot_dimension_numbers<[1], [1], [0], [0], [0, 0, 1, 0], [], []>} : vector<8x8xf32>, vector<8x8xf32>, vector<8x8xf32> -> vector<8x8xf32>
    %42 = arith.addf %41, %11 : vector<8x8xf32>
    %cst_18 = arith.constant dense<0xFF800000> : vector<8xf32>
    %43 = vector.multi_reduction <maximumf>, %42, %cst_18 [1] : vector<8x8xf32> to vector<8xf32>
    %44 = vector.shape_cast %43 : vector<8xf32> to vector<8x1xf32>
    %45 = vector.broadcast %44 : vector<8x1xf32> to vector<8x8xf32>
    %46 = arith.subf %42, %45 : vector<8x8xf32>
    %47 = math.exp %46 : vector<8x8xf32>
    %cst_19 = arith.constant dense<0.000000e+00> : vector<8xf32>
    %48 = vector.multi_reduction <add>, %47, %cst_19 [1] : vector<8x8xf32> to vector<8xf32>
    %49 = vector.shape_cast %48 : vector<8xf32> to vector<8x1xf32>
    %50 = tpu.reciprocal %49 {approx = true} : vector<8x1xf32> -> vector<8x1xf32>
    %51 = vector.broadcast %50 : vector<8x1xf32> to vector<8x8xf32>
    %52 = arith.mulf %47, %51 : vector<8x8xf32>
    %cst_20 = arith.constant dense<0.000000e+00> : vector<8x8xf32>
    %53 = tpu.matmul %52, %40, %cst_20 {dimension_numbers = #tpu.dot_dimension_numbers<[1], [0], [0], [1], [0, 0, 1, 1], [], []>} : vector<8x8xf32>, vector<8x8xf32>, vector<8x8xf32> -> vector<8x8xf32>
    %54 = vector.extract_strided_slice %3 {offsets = [8, 0], sizes = [8, 32], strides = [1, 1]} : vector<32x32xf32> to vector<8x32xf32>
    %cst_21 = arith.constant dense<0.000000e+00> : vector<8x32xf32>
    %55 = tpu.matmul %53, %54, %cst_21 {dimension_numbers = #tpu.dot_dimension_numbers<[1], [0], [0], [1], [0, 0, 1, 1], [], []>} : vector<8x8xf32>, vector<8x32xf32>, vector<8x32xf32> -> vector<8x32xf32>
    %56 = arith.addf %35, %55 : vector<8x32xf32>
    %57 = vector.extract_strided_slice %4 {offsets = [0, 16], sizes = [8, 8], strides = [1, 1]} : vector<8x96xf32> to vector<8x8xf32>
    %58 = vector.broadcast %5 : f32 to vector<8x8xf32>
    %59 = arith.mulf %57, %58 : vector<8x8xf32>
    %60 = vector.extract_strided_slice %4 {offsets = [0, 48], sizes = [8, 8], strides = [1, 1]} : vector<8x96xf32> to vector<8x8xf32>
    %61 = vector.extract_strided_slice %4 {offsets = [0, 80], sizes = [8, 8], strides = [1, 1]} : vector<8x96xf32> to vector<8x8xf32>
    %cst_22 = arith.constant dense<0.000000e+00> : vector<8x8xf32>
    %62 = tpu.matmul %59, %60, %cst_22 {dimension_numbers = #tpu.dot_dimension_numbers<[1], [1], [0], [0], [0, 0, 1, 0], [], []>} : vector<8x8xf32>, vector<8x8xf32>, vector<8x8xf32> -> vector<8x8xf32>
    %63 = arith.addf %62, %11 : vector<8x8xf32>
    %cst_23 = arith.constant dense<0xFF800000> : vector<8xf32>
    %64 = vector.multi_reduction <maximumf>, %63, %cst_23 [1] : vector<8x8xf32> to vector<8xf32>
    %65 = vector.shape_cast %64 : vector<8xf32> to vector<8x1xf32>
    %66 = vector.broadcast %65 : vector<8x1xf32> to vector<8x8xf32>
    %67 = arith.subf %63, %66 : vector<8x8xf32>
    %68 = math.exp %67 : vector<8x8xf32>
    %cst_24 = arith.constant dense<0.000000e+00> : vector<8xf32>
    %69 = vector.multi_reduction <add>, %68, %cst_24 [1] : vector<8x8xf32> to vector<8xf32>
    %70 = vector.shape_cast %69 : vector<8xf32> to vector<8x1xf32>
    %71 = tpu.reciprocal %70 {approx = true} : vector<8x1xf32> -> vector<8x1xf32>
    %72 = vector.broadcast %71 : vector<8x1xf32> to vector<8x8xf32>
    %73 = arith.mulf %68, %72 : vector<8x8xf32>
    %cst_25 = arith.constant dense<0.000000e+00> : vector<8x8xf32>
    %74 = tpu.matmul %73, %61, %cst_25 {dimension_numbers = #tpu.dot_dimension_numbers<[1], [0], [0], [1], [0, 0, 1, 1], [], []>} : vector<8x8xf32>, vector<8x8xf32>, vector<8x8xf32> -> vector<8x8xf32>
    %75 = vector.extract_strided_slice %3 {offsets = [16, 0], sizes = [8, 32], strides = [1, 1]} : vector<32x32xf32> to vector<8x32xf32>
    %cst_26 = arith.constant dense<0.000000e+00> : vector<8x32xf32>
    %76 = tpu.matmul %74, %75, %cst_26 {dimension_numbers = #tpu.dot_dimension_numbers<[1], [0], [0], [1], [0, 0, 1, 1], [], []>} : vector<8x8xf32>, vector<8x32xf32>, vector<8x32xf32> -> vector<8x32xf32>
    %77 = arith.addf %56, %76 : vector<8x32xf32>
    %78 = vector.extract_strided_slice %4 {offsets = [0, 24], sizes = [8, 8], strides = [1, 1]} : vector<8x96xf32> to vector<8x8xf32>
    %79 = vector.broadcast %5 : f32 to vector<8x8xf32>
    %80 = arith.mulf %78, %79 : vector<8x8xf32>
    %81 = vector.extract_strided_slice %4 {offsets = [0, 56], sizes = [8, 8], strides = [1, 1]} : vector<8x96xf32> to vector<8x8xf32>
    %82 = vector.extract_strided_slice %4 {offsets = [0, 88], sizes = [8, 8], strides = [1, 1]} : vector<8x96xf32> to vector<8x8xf32>
    %cst_27 = arith.constant dense<0.000000e+00> : vector<8x8xf32>
    %83 = tpu.matmul %80, %81, %cst_27 {dimension_numbers = #tpu.dot_dimension_numbers<[1], [1], [0], [0], [0, 0, 1, 0], [], []>} : vector<8x8xf32>, vector<8x8xf32>, vector<8x8xf32> -> vector<8x8xf32>
    %84 = arith.addf %83, %11 : vector<8x8xf32>
    %cst_28 = arith.constant dense<0xFF800000> : vector<8xf32>
    %85 = vector.multi_reduction <maximumf>, %84, %cst_28 [1] : vector<8x8xf32> to vector<8xf32>
    %86 = vector.shape_cast %85 : vector<8xf32> to vector<8x1xf32>
    %87 = vector.broadcast %86 : vector<8x1xf32> to vector<8x8xf32>
    %88 = arith.subf %84, %87 : vector<8x8xf32>
    %89 = math.exp %88 : vector<8x8xf32>
    %cst_29 = arith.constant dense<0.000000e+00> : vector<8xf32>
    %90 = vector.multi_reduction <add>, %89, %cst_29 [1] : vector<8x8xf32> to vector<8xf32>
    %91 = vector.shape_cast %90 : vector<8xf32> to vector<8x1xf32>
    %92 = tpu.reciprocal %91 {approx = true} : vector<8x1xf32> -> vector<8x1xf32>
    %93 = vector.broadcast %92 : vector<8x1xf32> to vector<8x8xf32>
    %94 = arith.mulf %89, %93 : vector<8x8xf32>
    %cst_30 = arith.constant dense<0.000000e+00> : vector<8x8xf32>
    %95 = tpu.matmul %94, %82, %cst_30 {dimension_numbers = #tpu.dot_dimension_numbers<[1], [0], [0], [1], [0, 0, 1, 1], [], []>} : vector<8x8xf32>, vector<8x8xf32>, vector<8x8xf32> -> vector<8x8xf32>
    %96 = vector.extract_strided_slice %3 {offsets = [24, 0], sizes = [8, 32], strides = [1, 1]} : vector<32x32xf32> to vector<8x32xf32>
    %cst_31 = arith.constant dense<0.000000e+00> : vector<8x32xf32>
    %97 = tpu.matmul %95, %96, %cst_31 {dimension_numbers = #tpu.dot_dimension_numbers<[1], [0], [0], [1], [0, 0, 1, 1], [], []>} : vector<8x8xf32>, vector<8x32xf32>, vector<8x32xf32> -> vector<8x32xf32>
    %98 = arith.addf %77, %97 : vector<8x32xf32>
    %c0_32 = arith.constant 0 : index
    %c0_33 = arith.constant 0 : index
    %c0_34 = arith.constant 0 : index
    %99 = vector.load %arg5[%c0_32, %c0_33, %c0_34] : memref<1x8x32xf32, #tpu.memory_space<vmem>>, vector<1x8x32xf32>
    %100 = vector.shape_cast %99 : vector<1x8x32xf32> to vector<8x32xf32>
    %101 = vector.shape_cast %98 : vector<8x32xf32> to vector<1x8x32xf32>
    tpu.vector_store %arg5[%c0_32, %c0_33, %c0_34], %101 {strides = array<i32>} : memref<1x8x32xf32, #tpu.memory_space<vmem>>, vector<1x8x32xf32>,
    return
  }
  func.func @transform_0(%arg0: i32) -> (i32, i32, i32) {
    %c0_i32 = arith.constant 0 : i32
    %c0_i32_0 = arith.constant 0 : i32
    %c0_i32_1 = arith.constant 0 : i32
    return %arg0, %c0_i32, %c0_i32_0 : i32, i32, i32
  }
  func.func @transform_1(%arg0: i32) -> (i32, i32) {
    %c0_i32 = arith.constant 0 : i32
    %c0_i32_0 = arith.constant 0 : i32
    %c0_i32_1 = arith.constant 0 : i32
    return %c0_i32, %c0_i32_0 : i32, i32
  }
  func.func @transform_2(%arg0: i32) -> (i32, i32) {
    %c0_i32 = arith.constant 0 : i32
    %c0_i32_0 = arith.constant 0 : i32
    %c0_i32_1 = arith.constant 0 : i32
    return %c0_i32, %c0_i32_0 : i32, i32
  }
  func.func @transform_3(%arg0: i32) -> (i32, i32) {
    %c0_i32 = arith.constant 0 : i32
    %c0_i32_0 = arith.constant 0 : i32
    %c0_i32_1 = arith.constant 0 : i32
    return %c0_i32, %c0_i32_0 : i32, i32
  }
  func.func @transform_4(%arg0: i32) -> (i32, i32, i32) {
    %c0_i32 = arith.constant 0 : i32
    %c0_i32_0 = arith.constant 0 : i32
    %c0_i32_1 = arith.constant 0 : i32
    return %arg0, %c0_i32, %c0_i32_0 : i32, i32, i32
  }
}

</mosaic_0001>

<llo_original>
// kernel: multi_head_attention.1
$region0: #{multi_head_attention.1}
  #allocation0 [shape = 'u32[]', space=smem, size = 0x4, offset = 0x4, fixed_abs, tag = 'smem constant byte address 0x4 - core index']
  #allocation1 [shape = 'u32[144,128]{1,0:T(1,128)}', space=vmem, size = 0x12000, scoped, tag = 'internal scratch']
  %s0 = inlined_call_operand.hbm [shape: f32[2,8,32], index: 0, kind: input, shape index: {}]
  %s1 = inlined_call_operand.hbm [shape: f32[32,96], index: 1, kind: input, shape index: {}]
  %s2 = inlined_call_operand.hbm [shape: f32[32,32], index: 2, kind: input, shape index: {}]
  %s3 = inlined_call_operand.vmem [shape: f32[1,32], index: 3, kind: input, shape index: {}]
  %s4 = inlined_call_operand.hbm [shape: f32[2,8,32], index: 4, kind: output, shape index: {}]
  %s5 = sld [smem:[#allocation0]]
  $region61: #{multi_head_attention.1} parent=0
    _
  %s7 = ssub.s32 1, %s5
  %s8 = scalar_select 0, %s7, %s5
  $region1: #{multi_head_attention.1} parent=0
    #allocation2 [shape = 'u8[8192]{0}', space=vmem, size = 0x2000, scoped, tag = 'input window, operand 0']
    #allocation3 [shape = 's32[2]{0}', space=sflag, size = 0x8, scoped, tag = 'scoped memory for multi_head_attention.1']
    #allocation4 [shape = 's32[2]{0}', space=sflag, size = 0x8, scoped, tag = 'scoped memory for multi_head_attention.1']
    #allocation5 [shape = 'u8[16384]{0}', space=vmem, size = 0x4000, scoped, tag = 'input window, operand 1, single buffered']
    #allocation6 [shape = 's32[1]{0}', space=sflag, size = 0x4, scoped, tag = 'scoped memory for multi_head_attention.1']
    #allocation7 [shape = 'u8[16384]{0}', space=vmem, size = 0x4000, scoped, tag = 'input window, operand 2, single buffered']
    #allocation8 [shape = 'u8[8192]{0}', space=vmem, size = 0x2000, scoped, tag = 'output window, operand 0']
    %9 = vsyncpa [#allocation3], 0
    %s10 = scalar_lea.sflag [#allocation3], 1
    %11 = vsyncpa %s10, 0
    %12 = vsyncpa [#allocation6], 0
    %13 = vsyncpa [#allocation4], 0
    %s14 = scalar_lea.sflag [#allocation4], 1
    %15 = vsyncpa %s14, 0
    loop: start=0, step=1, limit=4
    $region2: #{multi_head_attention.1} parent=1 // loop_pre_header
      _
    $region3: #{multi_head_attention.1} parent=1 // loop_header
      %s17 = sphi 0, %s21
      %p18 = scmp.ge.s32.totalorder %s17, 4
      %s27 = sphi 0, %s29
      %s30 = sphi 0, %s27
      %s31 = sphi 0, %s30
      %s47 = sphi 0, %s31
      %s51 = sphi 0, %s51
      %s53 = sphi 0, %s51
      %s54 = sphi 0, %s53
      %s68 = sphi 0, %s54
      %s72 = sphi 0, %s72
      %s74 = sphi 0, %s72
      %s75 = sphi 0, %s74
      %s89 = sphi 0, %s75
      %s93 = sphi 0, %s93
      %s95 = sphi 0, %s93
      %s96 = sphi 0, %s95
      %s110 = sphi 0, %s96
      %s116 = sphi 0, %s118
      %s119 = sphi 0, %s116
      %s120 = sphi 0, %s119
      %s136 = sphi 0, %s120
    $region4: #{multi_head_attention.1} parent=1 // loop_header_branch
      %20 = sbr.rel (%p18) target = $region8
    $region5: #{multi_head_attention.1} parent=1 // loop_body
      %s22 = ssub.s32 %s17, 1
      %s23 = ssub.s32 %s17, 2
      %s24 = sadd.s32 %s17, 1
      %s25 = ssub.s32 %s17, %s24
      %p26 = scmp.eq.s32.totalorder %s25, 0
      %s28 = sadd.s32 %s27, 1
      %s29 = scalar_select %p26, %s27, %s28
      %p32 = pneg %p26
      %p33 = scmp.eq.s32.totalorder %s17, 1
      %p34 = por %p32, %p33
      %p35 = scmp.ne.s32.totalorder %s27, %s30
      %p36 = scmp.eq.s32.totalorder %s17, 0
      %p37 = por %p35, %p36
      %p38 = scmp.ne.s32.totalorder %s27, %s30
      %p39 = scmp.eq.s32.totalorder %s22, 1
      %p40 = por %p38, %p39
      %p41 = scmp.ne.s32.totalorder %s30, %s31
      %p42 = scmp.eq.s32.totalorder %s22, 0
      %p43 = por %p41, %p42
      %p44 = scmp.ne.s32.totalorder %s30, %s31
      %p45 = scmp.eq.s32.totalorder %s23, 1
      %p46 = por %p44, %p45
      %p48 = scmp.ne.s32.totalorder %s31, %s47
      %p49 = scmp.eq.s32.totalorder %s23, 0
      %p50 = por %p48, %p49
      %s52 = sadd.s32 %s51, 1
      %p55 = scmp.eq.s32.totalorder %s17, 1
      %p56 = scmp.ne.s32.totalorder %s51, %s53
      %p57 = scmp.eq.s32.totalorder %s17, 0
      %p58 = por %p56, %p57
      %p59 = scmp.ne.s32.totalorder %s51, %s53
      %p60 = scmp.eq.s32.totalorder %s22, 1
      %p61 = por %p59, %p60
      %p62 = scmp.ne.s32.totalorder %s53, %s54
      %p63 = scmp.eq.s32.totalorder %s22, 0
      %p64 = por %p62, %p63
      %p65 = scmp.ne.s32.totalorder %s53, %s54
      %p66 = scmp.eq.s32.totalorder %s23, 1
      %p67 = por %p65, %p66
      %p69 = scmp.ne.s32.totalorder %s54, %s68
      %p70 = scmp.eq.s32.totalorder %s23, 0
      %p71 = por %p69, %p70
      %s73 = sadd.s32 %s72, 1
      %p76 = scmp.eq.s32.totalorder %s17, 1
      %p77 = scmp.ne.s32.totalorder %s72, %s74
      %p78 = scmp.eq.s32.totalorder %s17, 0
      %p79 = por %p77, %p78
      %p80 = scmp.ne.s32.totalorder %s72, %s74
      %p81 = scmp.eq.s32.totalorder %s22, 1
      %p82 = por %p80, %p81
      %p83 = scmp.ne.s32.totalorder %s74, %s75
      %p84 = scmp.eq.s32.totalorder %s22, 0
      %p85 = por %p83, %p84
      %p86 = scmp.ne.s32.totalorder %s74, %s75
      %p87 = scmp.eq.s32.totalorder %s23, 1
      %p88 = por %p86, %p87
      %p90 = scmp.ne.s32.totalorder %s75, %s89
      %p91 = scmp.eq.s32.totalorder %s23, 0
      %p92 = por %p90, %p91
      %s94 = sadd.s32 %s93, 1
      %p97 = scmp.eq.s32.totalorder %s17, 1
      %p98 = scmp.ne.s32.totalorder %s93, %s95
      %p99 = scmp.eq.s32.totalorder %s17, 0
      %p100 = por %p98, %p99
      %p101 = scmp.ne.s32.totalorder %s93, %s95
      %p102 = scmp.eq.s32.totalorder %s22, 1
      %p103 = por %p101, %p102
      %p104 = scmp.ne.s32.totalorder %s95, %s96
      %p105 = scmp.eq.s32.totalorder %s22, 0
      %p106 = por %p104, %p105
      %p107 = scmp.ne.s32.totalorder %s95, %s96
      %p108 = scmp.eq.s32.totalorder %s23, 1
      %p109 = por %p107, %p108
      %p111 = scmp.ne.s32.totalorder %s96, %s110
      %p112 = scmp.eq.s32.totalorder %s23, 0
      %p113 = por %p111, %p112
      %s114 = ssub.s32 %s17, %s24
      %p115 = scmp.eq.s32.totalorder %s114, 0
      %s117 = sadd.s32 %s116, 1
      %s118 = scalar_select %p115, %s116, %s117
      %p121 = pneg %p115
      %p122 = scmp.eq.s32.totalorder %s17, 1
      %p123 = por %p121, %p122
      %p124 = scmp.ne.s32.totalorder %s116, %s119
      %p125 = scmp.eq.s32.totalorder %s17, 0
      %p126 = por %p124, %p125
      %p127 = scmp.ne.s32.totalorder %s116, %s119
      %p128 = scmp.eq.s32.totalorder %s22, 1
      %p129 = por %p127, %p128
      %p130 = scmp.ne.s32.totalorder %s119, %s120
      %p131 = scmp.eq.s32.totalorder %s22, 0
      %p132 = por %p130, %p131
      %p133 = scmp.ne.s32.totalorder %s119, %s120
      %p134 = scmp.eq.s32.totalorder %s23, 1
      %p135 = por %p133, %p134
      %p137 = scmp.ne.s32.totalorder %s120, %s136
      %p138 = scmp.eq.s32.totalorder %s23, 0
      %p139 = por %p137, %p138
      %p140 = scmp.le.s32.totalorder 1, %s17
      %p141 = scmp.lt.s32.totalorder %s17, 3
      %p142 = pnand %p140, %p141
      %p143 = pneg %p142
      // Predicated region
      $region9: #{multi_head_attention.1} parent=5 // pred_check
        _
      $region10: #{multi_head_attention.1} parent=5 // pred_check_branch
        %145 = sbr.rel (%p142) target = $region12
      $region11: #{multi_head_attention.1} parent=5 // pred_region
        %s146 = ssub.s32 %s17, 1
        // Predicated region
        $region13: #{multi_head_attention.1} parent=11 // pred_check
          %p147 = pneg %p64
        $region14: #{multi_head_attention.1} parent=11 // pred_check_branch
          %149 = sbr.rel (%p147) target = $region16
        $region15: #{multi_head_attention.1} parent=11 // pred_region
          %s151 = ssub.s32 512, 512
          %152 = vsyncadd [#allocation6], %s151
          %s153 = sshll.u32 [#allocation5], 4
          %s154 = int_to_ptr.vmem [resolvable:$true] %s153
          %159 = dma.hbm_to_vmem [thread:$0]  %s1, 512, %s154, [#allocation6], 128, 128, 8
        $region16: #{multi_head_attention.1} parent=11 // pred_fallthru
          _
        // Predicated region
        $region17: #{multi_head_attention.1} parent=11 // pred_check
          %p160 = pneg %p85
        $region18: #{multi_head_attention.1} parent=11 // pred_check_branch
          %162 = sbr.rel (%p160) target = $region20
        $region19: #{multi_head_attention.1} parent=11 // pred_region
          %s164 = ssub.s32 512, 512
          %165 = vsyncadd [#allocation6], %s164
          %s166 = sshll.u32 [#allocation7], 4
          %s167 = int_to_ptr.vmem [resolvable:$true] %s166
          %172 = dma.hbm_to_vmem [thread:$0]  %s2, 512, %s167, [#allocation6], 128, 128, 8
        $region20: #{multi_head_attention.1} parent=11 // pred_fallthru
          _
        // Predicated region
        $region21: #{multi_head_attention.1} parent=11 // pred_check
          %p173 = pneg %p106
        $region22: #{multi_head_attention.1} parent=11 // pred_check_branch
          %175 = sbr.rel (%p173) target = $region24
        $region23: #{multi_head_attention.1} parent=11 // pred_region
          _
        $region24: #{multi_head_attention.1} parent=11 // pred_fallthru
          _
      $region12: #{multi_head_attention.1} parent=5 // pred_fallthru
        _
      %p176 = scmp.lt.s32.totalorder %s17, 2
      // Predicated region
      $region25: #{multi_head_attention.1} parent=5 // pred_check
        %p177 = pneg %p176
      $region26: #{multi_head_attention.1} parent=5 // pred_check_branch
        %179 = sbr.rel (%p177) target = $region28
      $region27: #{multi_head_attention.1} parent=5 // pred_region
        // Predicated region
        $region29: #{multi_head_attention.1} parent=27 // pred_check
          %p180 = pneg %p37
        $region30: #{multi_head_attention.1} parent=27 // pred_check_branch
          %182 = sbr.rel (%p180) target = $region32
        $region31: #{multi_head_attention.1} parent=27 // pred_region
          %s183 = sand.u32 %s27, 1
          %s184 = scalar_lea.sflag [#allocation3], %s183
          %s185 = sand.u32 %s27, 1
          %s186 = smul.addr %s185, 8
          %s187 = scalar_lea.vmem [#allocation2], %s186
          %s189 = ssub.s32 128, 128
          %190 = vsyncadd %s184, %s189
          %s191 = smul.addr %s17, 128
          %s192 = scalar_lea.hbm %s0, %s191
          %s194 = sshll.u32 %s187, 4
          %s195 = int_to_ptr.vmem [resolvable:$true] %s194
          %197 = dma.hbm_to_vmem [thread:$0]  %s192, 128, %s195, %s184
        $region32: #{multi_head_attention.1} parent=27 // pred_fallthru
          _
      $region28: #{multi_head_attention.1} parent=5 // pred_fallthru
        _
      %p198 = scmp.le.s32.totalorder 1, %s17
      %p199 = scmp.lt.s32.totalorder %s17, 3
      %p200 = pnand %p198, %p199
      %p201 = pneg %p200
      // Predicated region
      $region33: #{multi_head_attention.1} parent=5 // pred_check
        _
      $region34: #{multi_head_attention.1} parent=5 // pred_check_branch
        %203 = sbr.rel (%p200) target = $region36
      $region35: #{multi_head_attention.1} parent=5 // pred_region
        %s204 = ssub.s32 %s17, 1
        %s205 = sand.u32 %s30, 1
        %s206 = scalar_lea.sflag [#allocation3], %s205
        %s207 = sand.u32 %s30, 1
        %s208 = smul.addr %s207, 8
        %s209 = scalar_lea.vmem [#allocation2], %s208
        // Predicated region
        $region37: #{multi_head_attention.1} parent=35 // pred_check
          %p210 = pneg %p43
        $region38: #{multi_head_attention.1} parent=35 // pred_check_branch
          %212 = sbr.rel (%p210) target = $region40
        $region39: #{multi_head_attention.1} parent=35 // pred_region
          %213 = dma.done %s206, 128
        $region40: #{multi_head_attention.1} parent=35 // pred_fallthru
          _
        // Predicated region
        $region41: #{multi_head_attention.1} parent=35 // pred_check
          %p214 = pneg %p64
        $region42: #{multi_head_attention.1} parent=35 // pred_check_branch
          %216 = sbr.rel (%p214) target = $region44
        $region43: #{multi_head_attention.1} parent=35 // pred_region
          %217 = dma.done [#allocation6], 512
        $region44: #{multi_head_attention.1} parent=35 // pred_fallthru
          _
        // Predicated region
        $region45: #{multi_head_attention.1} parent=35 // pred_check
          %p218 = pneg %p85
        $region46: #{multi_head_attention.1} parent=35 // pred_check_branch
          %220 = sbr.rel (%p218) target = $region48
        $region47: #{multi_head_attention.1} parent=35 // pred_region
          %221 = dma.done [#allocation6], 512
        $region48: #{multi_head_attention.1} parent=35 // pred_fallthru
          _
        %s222 = sand.u32 %s30, 1
        %s223 = scalar_lea.sflag [#allocation3], %s222
        %s224 = sand.u32 %s30, 1
        %s225 = smul.addr %s224, 8
        %s226 = scalar_lea.vmem [#allocation2], %s225
        %p227 = pneg %p43
        %p228 = pneg %p40
        %p229 = pneg %p64
        %p230 = pneg %p61
        %p231 = pneg %p85
        %p232 = pneg %p82
        %p233 = pneg %p106
        %p234 = pneg %p103
        %p235 = pneg %p132
        %p236 = pneg %p129
        %s237 = sand.u32 %s119, 1
        %s238 = scalar_lea.sflag [#allocation4], %s237
        %s239 = sand.u32 %s119, 1
        %s240 = smul.addr %s239, 8
        %s241 = scalar_lea.vmem [#allocation8], %s240
        %v242 = vld [vmem:[%s209] sm:$0xff]
        %v243 = vld [vmem:[#allocation5] sm:$0xff]
        %v244 = vld [vmem:[#allocation5 + $0x8] sm:$0xff]
        %v245 = vld [vmem:[#allocation5 + $0x10] sm:$0xff]
        %v246 = vld [vmem:[#allocation5 + $0x18] sm:$0xff]
        %v247 = vld [vmem:[#allocation7] sm:$0xff]
        %v248 = vld [vmem:[#allocation7 + $0x8] sm:$0xff]
        %v249 = vld [vmem:[#allocation7 + $0x10] sm:$0xff]
        %v250 = vld [vmem:[#allocation7 + $0x18] sm:$0xff]
        %vm251 = vcmask 261120
        %v253 = vsel %vm251, %v242, 0
        %255 = vmatprep.subr.mxu0 0.0
        %256 = vmatpush1.msra.mxu0 0.0
        %257 = vmatprep.subr.mxu0 0.0
        %258 = vmatpush1.msra.mxu0 0.0
        %259 = vmatprep.subr.mxu0 0.0
        %260 = vmatpush1.msra.mxu0 0.0
        %261 = vmatprep.subr.mxu0 0.0
        %262 = vmatpush1.msra.mxu0 0.0
        %263 = vmatprep.subr.mxu0 0.0
        %264 = vmatpush1.msra.mxu0 0.0
        %265 = vmatprep.subr.mxu0 0.0
        %266 = vmatpush1.msra.mxu0 0.0
        %267 = vmatprep.subr.mxu0 0.0
        %268 = vmatpush1.msra.mxu0 0.0
        %269 = vmatprep.subr.mxu0 0.0
        %270 = vmatpush1.msra.mxu0 0.0
        %271 = vmatprep.subr.mxu0 0.0
        %272 = vmatpush1.msra.mxu0 0.0
        %273 = vmatprep.subr.mxu0 0.0
        %274 = vmatpush1.msra.mxu0 0.0
        %275 = vmatprep.subr.mxu0 0.0
        %276 = vmatpush1.msra.mxu0 0.0
        %277 = vmatprep.subr.mxu0 0.0
        %278 = vmatpush1.msra.mxu0 0.0
        %279 = vmatprep.subr.mxu0 0.0
        %280 = vmatpush1.msra.mxu0 %v246
        %281 = vmatprep.subr.mxu0 0.0
        %282 = vmatpush1.msra.mxu0 %v245
        %283 = vmatprep.subr.mxu0 0.0
        %284 = vmatpush1.msra.mxu0 %v244
        %285 = vmatprep.subr.mxu0 0.0
        %286 = vmatpush1.msra.mxu0 %v243
        %287 = vmatprep.subr.mxu0 0.0
        %288 = vmatpush2.msra.mxu0 0.0
        %289 = vmatprep.subr.mxu0 0.0
        %290 = vmatpush2.msra.mxu0 0.0
        %291 = vmatprep.subr.mxu0 0.0
        %292 = vmatpush2.msra.mxu0 0.0
        %293 = vmatprep.subr.mxu0 0.0
        %294 = vmatpush2.msra.mxu0 0.0
        %295 = vmatprep.subr.mxu0 0.0
        %296 = vmatpush2.msra.mxu0 0.0
        %297 = vmatprep.subr.mxu0 0.0
        %298 = vmatpush2.msra.mxu0 0.0
        %299 = vmatprep.subr.mxu0 0.0
        %300 = vmatpush2.msra.mxu0 0.0
        %301 = vmatprep.subr.mxu0 0.0
        %302 = vmatpush2.msra.mxu0 0.0
        %303 = vmatprep.subr.mxu0 0.0
        %304 = vmatpush2.msra.mxu0 0.0
        %305 = vmatprep.subr.mxu0 0.0
        %306 = vmatpush2.msra.mxu0 0.0
        %307 = vmatprep.subr.mxu0 0.0
        %308 = vmatpush2.msra.mxu0 0.0
        %309 = vmatprep.subr.mxu0 0.0
        %310 = vmatpush2.msra.mxu0 0.0
        %311 = vmatprep.subr.mxu0 0.0
        %312 = vmatpush2.msra.mxu0 0.0
        %313 = vmatprep.subr.mxu0 0.0
        %314 = vmatpush2.msra.mxu0 0.0
        %315 = vmatprep.subr.mxu0 0.0
        %316 = vmatpush2.msra.mxu0 0.0
        %317 = vmatprep.subr.mxu0 0.0
        %318 = vmatpush2.msra.mxu0 0.0
        %319 = vmatprep.mubr.f32.mxu0 0.0
        %320 = vmatmul.mubr.f32.gmra.mxu0 %v253
        %v321 = vpop.f32.mrf.mxu0
        %v322 = vadd.f32 0.0, %v321
        %v323 = vpop.f32.mrf.mxu0
        %324 = vdwg.mxu0
        %v325 = vlaneseq
        %v326 = vshrl.u32 %v325, 7
        %v327 = vlaneseq
        %v328 = vand.u32 %v327, 127
        %vm329 = vcmp.ge.s32.totalorder %v326, %v328
        %v330 = vsel %vm329, 0.0, -1e+30
        %v331 = vld [vmem:[%s3] sm:$0x1]
        %v333 = vlaneseq
        %v334 = vshrl.u32 %v333, 7
        %v335 = vsub.s32 0, %v334
        %v336 = vrot.slane %v331, %v335
        %v338 = vmul.f32 %v322, 0.17677669
        %340 = vrot.lane.b32.xlu0 %v322, 96
        %v341 = vpop.permute.xlu0 %340
        %vm342 = vcmask 64512
        %v344 = vsel %vm342, %v338, 0
        %v346 = vsel %vm342, %v341, 0
        %348 = vmatprep.subr.mxu0 0.0
        %349 = vmatpush1.xpose.msra.mxu0 0.0
        %350 = vmatprep.subr.mxu0 0.0
        %351 = vmatpush1.xpose.msra.mxu0 0.0
        %352 = vmatprep.subr.mxu0 0.0
        %353 = vmatpush1.xpose.msra.mxu0 0.0
        %354 = vmatprep.subr.mxu0 0.0
        %355 = vmatpush1.xpose.msra.mxu0 0.0
        %356 = vmatprep.subr.mxu0 0.0
        %357 = vmatpush1.xpose.msra.mxu0 0.0
        %358 = vmatprep.subr.mxu0 0.0
        %359 = vmatpush1.xpose.msra.mxu0 0.0
        %360 = vmatprep.subr.mxu0 0.0
        %361 = vmatpush1.xpose.msra.mxu0 0.0
        %362 = vmatprep.subr.mxu0 0.0
        %363 = vmatpush1.xpose.msra.mxu0 0.0
        %364 = vmatprep.subr.mxu0 0.0
        %365 = vmatpush1.xpose.msra.mxu0 0.0
        %366 = vmatprep.subr.mxu0 0.0
        %367 = vmatpush1.xpose.msra.mxu0 0.0
        %368 = vmatprep.subr.mxu0 0.0
        %369 = vmatpush1.xpose.msra.mxu0 0.0
        %370 = vmatprep.subr.mxu0 0.0
        %371 = vmatpush1.xpose.msra.mxu0 0.0
        %372 = vmatprep.subr.mxu0 0.0
        %373 = vmatpush1.xpose.msra.mxu0 0.0
        %374 = vmatprep.subr.mxu0 0.0
        %375 = vmatpush1.xpose.msra.mxu0 0.0
        %376 = vmatprep.subr.mxu0 0.0
        %377 = vmatpush1.xpose.msra.mxu0 0.0
        %378 = vmatprep.subr.mxu0 0.0
        %379 = vmatpush1.xpose.msra.mxu0 %v346
        %380 = vmatprep.subr.mxu0 0.0
        %381 = vmatpush2.xpose.msra.mxu0 0.0
        %382 = vmatprep.subr.mxu0 0.0
        %383 = vmatpush2.xpose.msra.mxu0 0.0
        %384 = vmatprep.subr.mxu0 0.0
        %385 = vmatpush2.xpose.msra.mxu0 0.0
        %386 = vmatprep.subr.mxu0 0.0
        %387 = vmatpush2.xpose.msra.mxu0 0.0
        %388 = vmatprep.subr.mxu0 0.0
        %389 = vmatpush2.xpose.msra.mxu0 0.0
        %390 = vmatprep.subr.mxu0 0.0
        %391 = vmatpush2.xpose.msra.mxu0 0.0
        %392 = vmatprep.subr.mxu0 0.0
        %393 = vmatpush2.xpose.msra.mxu0 0.0
        %394 = vmatprep.subr.mxu0 0.0
        %395 = vmatpush2.xpose.msra.mxu0 0.0
        %396 = vmatprep.subr.mxu0 0.0
        %397 = vmatpush2.xpose.msra.mxu0 0.0
        %398 = vmatprep.subr.mxu0 0.0
        %399 = vmatpush2.xpose.msra.mxu0 0.0
        %400 = vmatprep.subr.mxu0 0.0
        %401 = vmatpush2.xpose.msra.mxu0 0.0
        %402 = vmatprep.subr.mxu0 0.0
        %403 = vmatpush2.xpose.msra.mxu0 0.0
        %404 = vmatprep.subr.mxu0 0.0
        %405 = vmatpush2.xpose.msra.mxu0 0.0
        %406 = vmatprep.subr.mxu0 0.0
        %407 = vmatpush2.xpose.msra.mxu0 0.0
        %408 = vmatprep.subr.mxu0 0.0
        %409 = vmatpush2.xpose.msra.mxu0 0.0
        %410 = vmatprep.subr.mxu0 0.0
        %411 = vmatpush2.xpose.msra.mxu0 0.0
        %412 = vmatprep.mubr.f32.mxu0 0.0
        %413 = vmatmul.mubr.f32.gmra.mxu0 %v344
        %v414 = vpop.f32.mrf.mxu0
        %v415 = vadd.f32 %v330, %v414
        %v416 = vpop.f32.mrf.mxu0
        %417 = vdwg.mxu0
        %v418 = vsel %vm342, %v415, -inf
        %419 = vmax.xlane.f32.xlu0 %v418
        %v420 = vpop.xlane.xlu0 %419
        %v421 = vsub.f32 %v415, %v420
        %v422 = vmul.f32 %v421, 1.442695
        %v423 = vpow.pop %v422
        %v424 = vsel %vm342, %v423, 0.0
        %425 = vadd.xlane.f32.xlu0 %v424
        %v426 = vpop.xlane.xlu0 %425
        %v427 = vrcp.pop %v426
        %v428 = vmul.f32 %v423, %v427
        %429 = vrot.lane.b32.xlu0 %v322, 64
        %v430 = vpop.permute.xlu0 %429
        %v433 = vsel %vm342, %v428, 0
        %435 = vmatprep.subr.mxu0 0.0
        %436 = vmatpush1.msra.mxu0 0.0
        %437 = vmatprep.subr.mxu0 0.0
        %438 = vmatpush1.msra.mxu0 0.0
        %439 = vmatprep.subr.mxu0 0.0
        %440 = vmatpush1.msra.mxu0 0.0
        %441 = vmatprep.subr.mxu0 0.0
        %442 = vmatpush1.msra.mxu0 0.0
        %443 = vmatprep.subr.mxu0 0.0
        %444 = vmatpush1.msra.mxu0 0.0
        %445 = vmatprep.subr.mxu0 0.0
        %446 = vmatpush1.msra.mxu0 0.0
        %447 = vmatprep.subr.mxu0 0.0
        %448 = vmatpush1.msra.mxu0 0.0
        %449 = vmatprep.subr.mxu0 0.0
        %450 = vmatpush1.msra.mxu0 0.0
        %451 = vmatprep.subr.mxu0 0.0
        %452 = vmatpush1.msra.mxu0 0.0
        %453 = vmatprep.subr.mxu0 0.0
        %454 = vmatpush1.msra.mxu0 0.0
        %455 = vmatprep.subr.mxu0 0.0
        %456 = vmatpush1.msra.mxu0 0.0
        %457 = vmatprep.subr.mxu0 0.0
        %458 = vmatpush1.msra.mxu0 0.0
        %459 = vmatprep.subr.mxu0 0.0
        %460 = vmatpush1.msra.mxu0 0.0
        %461 = vmatprep.subr.mxu0 0.0
        %462 = vmatpush1.msra.mxu0 0.0
        %463 = vmatprep.subr.mxu0 0.0
        %464 = vmatpush1.msra.mxu0 0.0
        %465 = vmatprep.subr.mxu0 0.0
        %466 = vmatpush1.msra.mxu0 %v430
        %467 = vmatprep.subr.mxu0 0.0
        %468 = vmatpush2.msra.mxu0 0.0
        %469 = vmatprep.subr.mxu0 0.0
        %470 = vmatpush2.msra.mxu0 0.0
        %471 = vmatprep.subr.mxu0 0.0
        %472 = vmatpush2.msra.mxu0 0.0
        %473 = vmatprep.subr.mxu0 0.0
        %474 = vmatpush2.msra.mxu0 0.0
        %475 = vmatprep.subr.mxu0 0.0
        %476 = vmatpush2.msra.mxu0 0.0
        %477 = vmatprep.subr.mxu0 0.0
        %478 = vmatpush2.msra.mxu0 0.0
        %479 = vmatprep.subr.mxu0 0.0
        %480 = vmatpush2.msra.mxu0 0.0
        %481 = vmatprep.subr.mxu0 0.0
        %482 = vmatpush2.msra.mxu0 0.0
        %483 = vmatprep.subr.mxu0 0.0
        %484 = vmatpush2.msra.mxu0 0.0
        %485 = vmatprep.subr.mxu0 0.0
        %486 = vmatpush2.msra.mxu0 0.0
        %487 = vmatprep.subr.mxu0 0.0
        %488 = vmatpush2.msra.mxu0 0.0
        %489 = vmatprep.subr.mxu0 0.0
        %490 = vmatpush2.msra.mxu0 0.0
        %491 = vmatprep.subr.mxu0 0.0
        %492 = vmatpush2.msra.mxu0 0.0
        %493 = vmatprep.subr.mxu0 0.0
        %494 = vmatpush2.msra.mxu0 0.0
        %495 = vmatprep.subr.mxu0 0.0
        %496 = vmatpush2.msra.mxu0 0.0
        %497 = vmatprep.subr.mxu0 0.0
        %498 = vmatpush2.msra.mxu0 0.0
        %499 = vmatprep.mubr.f32.mxu0 0.0
        %500 = vmatmul.mubr.f32.gmra.mxu0 %v433
        %v501 = vpop.f32.mrf.mxu0
        %v502 = vadd.f32 0.0, %v501
        %v503 = vpop.f32.mrf.mxu0
        %504 = vdwg.mxu0
        %v506 = vsel %vm342, %v502, 0
        %508 = vmatprep.subr.mxu0 0.0
        %509 = vmatpush1.msra.mxu0 0.0
        %510 = vmatprep.subr.mxu0 0.0
        %511 = vmatpush1.msra.mxu0 0.0
        %512 = vmatprep.subr.mxu0 0.0
        %513 = vmatpush1.msra.mxu0 0.0
        %514 = vmatprep.subr.mxu0 0.0
        %515 = vmatpush1.msra.mxu0 0.0
        %516 = vmatprep.subr.mxu0 0.0
        %517 = vmatpush1.msra.mxu0 0.0
        %518 = vmatprep.subr.mxu0 0.0
        %519 = vmatpush1.msra.mxu0 0.0
        %520 = vmatprep.subr.mxu0 0.0
        %521 = vmatpush1.msra.mxu0 0.0
        %522 = vmatprep.subr.mxu0 0.0
        %523 = vmatpush1.msra.mxu0 0.0
        %524 = vmatprep.subr.mxu0 0.0
        %525 = vmatpush1.msra.mxu0 0.0
        %526 = vmatprep.subr.mxu0 0.0
        %527 = vmatpush1.msra.mxu0 0.0
        %528 = vmatprep.subr.mxu0 0.0
        %529 = vmatpush1.msra.mxu0 0.0
        %530 = vmatprep.subr.mxu0 0.0
        %531 = vmatpush1.msra.mxu0 0.0
        %532 = vmatprep.subr.mxu0 0.0
        %533 = vmatpush1.msra.mxu0 0.0
        %534 = vmatprep.subr.mxu0 0.0
        %535 = vmatpush1.msra.mxu0 0.0
        %536 = vmatprep.subr.mxu0 0.0
        %537 = vmatpush1.msra.mxu0 0.0
        %538 = vmatprep.subr.mxu0 0.0
        %539 = vmatpush1.msra.mxu0 %v247
        %540 = vmatprep.subr.mxu0 0.0
        %541 = vmatpush2.msra.mxu0 0.0
        %542 = vmatprep.subr.mxu0 0.0
        %543 = vmatpush2.msra.mxu0 0.0
        %544 = vmatprep.subr.mxu0 0.0
        %545 = vmatpush2.msra.mxu0 0.0
        %546 = vmatprep.subr.mxu0 0.0
        %547 = vmatpush2.msra.mxu0 0.0
        %548 = vmatprep.subr.mxu0 0.0
        %549 = vmatpush2.msra.mxu0 0.0
        %550 = vmatprep.subr.mxu0 0.0
        %551 = vmatpush2.msra.mxu0 0.0
        %552 = vmatprep.subr.mxu0 0.0
        %553 = vmatpush2.msra.mxu0 0.0
        %554 = vmatprep.subr.mxu0 0.0
        %555 = vmatpush2.msra.mxu0 0.0
        %556 = vmatprep.subr.mxu0 0.0
        %557 = vmatpush2.msra.mxu0 0.0
        %558 = vmatprep.subr.mxu0 0.0
        %559 = vmatpush2.msra.mxu0 0.0
        %560 = vmatprep.subr.mxu0 0.0
        %561 = vmatpush2.msra.mxu0 0.0
        %562 = vmatprep.subr.mxu0 0.0
        %563 = vmatpush2.msra.mxu0 0.0
        %564 = vmatprep.subr.mxu0 0.0
        %565 = vmatpush2.msra.mxu0 0.0
        %566 = vmatprep.subr.mxu0 0.0
        %567 = vmatpush2.msra.mxu0 0.0
        %568 = vmatprep.subr.mxu0 0.0
        %569 = vmatpush2.msra.mxu0 0.0
        %570 = vmatprep.subr.mxu0 0.0
        %571 = vmatpush2.msra.mxu0 0.0
        %572 = vmatprep.mubr.f32.mxu0 0.0
        %573 = vmatmul.mubr.f32.gmra.mxu0 %v506
        %v574 = vpop.f32.mrf.mxu0
        %v575 = vadd.f32 0.0, %v574
        %v576 = vpop.f32.mrf.mxu0
        %577 = vdwg.mxu0
        %v578 = vadd.f32 %v336, %v575
        %579 = vrot.lane.b32.xlu0 %v338, 120
        %v580 = vpop.permute.xlu0 %579
        %581 = vrot.lane.b32.xlu0 %v322, 88
        %v582 = vpop.permute.xlu0 %581
        %v583 = vsel %vm342, %v580, 0
        %v585 = vsel %vm342, %v582, 0
        %587 = vmatprep.subr.mxu0 0.0
        %588 = vmatpush1.xpose.msra.mxu0 0.0
        %589 = vmatprep.subr.mxu0 0.0
        %590 = vmatpush1.xpose.msra.mxu0 0.0
        %591 = vmatprep.subr.mxu0 0.0
        %592 = vmatpush1.xpose.msra.mxu0 0.0
        %593 = vmatprep.subr.mxu0 0.0
        %594 = vmatpush1.xpose.msra.mxu0 0.0
        %595 = vmatprep.subr.mxu0 0.0
        %596 = vmatpush1.xpose.msra.mxu0 0.0
        %597 = vmatprep.subr.mxu0 0.0
        %598 = vmatpush1.xpose.msra.mxu0 0.0
        %599 = vmatprep.subr.mxu0 0.0
        %600 = vmatpush1.xpose.msra.mxu0 0.0
        %601 = vmatprep.subr.mxu0 0.0
        %602 = vmatpush1.xpose.msra.mxu0 0.0
        %603 = vmatprep.subr.mxu0 0.0
        %604 = vmatpush1.xpose.msra.mxu0 0.0
        %605 = vmatprep.subr.mxu0 0.0
        %606 = vmatpush1.xpose.msra.mxu0 0.0
        %607 = vmatprep.subr.mxu0 0.0
        %608 = vmatpush1.xpose.msra.mxu0 0.0
        %609 = vmatprep.subr.mxu0 0.0
        %610 = vmatpush1.xpose.msra.mxu0 0.0
        %611 = vmatprep.subr.mxu0 0.0
        %612 = vmatpush1.xpose.msra.mxu0 0.0
        %613 = vmatprep.subr.mxu0 0.0
        %614 = vmatpush1.xpose.msra.mxu0 0.0
        %615 = vmatprep.subr.mxu0 0.0
        %616 = vmatpush1.xpose.msra.mxu0 0.0
        %617 = vmatprep.subr.mxu0 0.0
        %618 = vmatpush1.xpose.msra.mxu0 %v585
        %619 = vmatprep.subr.mxu0 0.0
        %620 = vmatpush2.xpose.msra.mxu0 0.0
        %621 = vmatprep.subr.mxu0 0.0
        %622 = vmatpush2.xpose.msra.mxu0 0.0
        %623 = vmatprep.subr.mxu0 0.0
        %624 = vmatpush2.xpose.msra.mxu0 0.0
        %625 = vmatprep.subr.mxu0 0.0
        %626 = vmatpush2.xpose.msra.mxu0 0.0
        %627 = vmatprep.subr.mxu0 0.0
        %628 = vmatpush2.xpose.msra.mxu0 0.0
        %629 = vmatprep.subr.mxu0 0.0
        %630 = vmatpush2.xpose.msra.mxu0 0.0
        %631 = vmatprep.subr.mxu0 0.0
        %632 = vmatpush2.xpose.msra.mxu0 0.0
        %633 = vmatprep.subr.mxu0 0.0
        %634 = vmatpush2.xpose.msra.mxu0 0.0
        %635 = vmatprep.subr.mxu0 0.0
        %636 = vmatpush2.xpose.msra.mxu0 0.0
        %637 = vmatprep.subr.mxu0 0.0
        %638 = vmatpush2.xpose.msra.mxu0 0.0
        %639 = vmatprep.subr.mxu0 0.0
        %640 = vmatpush2.xpose.msra.mxu0 0.0
        %641 = vmatprep.subr.mxu0 0.0
        %642 = vmatpush2.xpose.msra.mxu0 0.0
        %643 = vmatprep.subr.mxu0 0.0
        %644 = vmatpush2.xpose.msra.mxu0 0.0
        %645 = vmatprep.subr.mxu0 0.0
        %646 = vmatpush2.xpose.msra.mxu0 0.0
        %647 = vmatprep.subr.mxu0 0.0
        %648 = vmatpush2.xpose.msra.mxu0 0.0
        %649 = vmatprep.subr.mxu0 0.0
        %650 = vmatpush2.xpose.msra.mxu0 0.0
        %651 = vmatprep.mubr.f32.mxu0 0.0
        %652 = vmatmul.mubr.f32.gmra.mxu0 %v583
        %v653 = vpop.f32.mrf.mxu0
        %v654 = vadd.f32 %v330, %v653
        %v655 = vpop.f32.mrf.mxu0
        %656 = vdwg.mxu0
        %v657 = vsel %vm342, %v654, -inf
        %658 = vmax.xlane.f32.xlu0 %v657
        %v659 = vpop.xlane.xlu0 %658
        %v660 = vsub.f32 %v654, %v659
        %v661 = vmul.f32 %v660, 1.442695
        %v662 = vpow.pop %v661
        %v663 = vsel %vm342, %v662, 0.0
        %664 = vadd.xlane.f32.xlu0 %v663
        %v665 = vpop.xlane.xlu0 %664
        %v666 = vrcp.pop %v665
        %v667 = vmul.f32 %v662, %v666
        %668 = vrot.lane.b32.xlu0 %v322, 56
        %v669 = vpop.permute.xlu0 %668
        %v672 = vsel %vm342, %v667, 0
        %674 = vmatprep.subr.mxu0 0.0
        %675 = vmatpush1.msra.mxu0 0.0
        %676 = vmatprep.subr.mxu0 0.0
        %677 = vmatpush1.msra.mxu0 0.0
        %678 = vmatprep.subr.mxu0 0.0
        %679 = vmatpush1.msra.mxu0 0.0
        %680 = vmatprep.subr.mxu0 0.0
        %681 = vmatpush1.msra.mxu0 0.0
        %682 = vmatprep.subr.mxu0 0.0
        %683 = vmatpush1.msra.mxu0 0.0
        %684 = vmatprep.subr.mxu0 0.0
        %685 = vmatpush1.msra.mxu0 0.0
        %686 = vmatprep.subr.mxu0 0.0
        %687 = vmatpush1.msra.mxu0 0.0
        %688 = vmatprep.subr.mxu0 0.0
        %689 = vmatpush1.msra.mxu0 0.0
        %690 = vmatprep.subr.mxu0 0.0
        %691 = vmatpush1.msra.mxu0 0.0
        %692 = vmatprep.subr.mxu0 0.0
        %693 = vmatpush1.msra.mxu0 0.0
        %694 = vmatprep.subr.mxu0 0.0
        %695 = vmatpush1.msra.mxu0 0.0
        %696 = vmatprep.subr.mxu0 0.0
        %697 = vmatpush1.msra.mxu0 0.0
        %698 = vmatprep.subr.mxu0 0.0
        %699 = vmatpush1.msra.mxu0 0.0
        %700 = vmatprep.subr.mxu0 0.0
        %701 = vmatpush1.msra.mxu0 0.0
        %702 = vmatprep.subr.mxu0 0.0
        %703 = vmatpush1.msra.mxu0 0.0
        %704 = vmatprep.subr.mxu0 0.0
        %705 = vmatpush1.msra.mxu0 %v669
        %706 = vmatprep.subr.mxu0 0.0
        %707 = vmatpush2.msra.mxu0 0.0
        %708 = vmatprep.subr.mxu0 0.0
        %709 = vmatpush2.msra.mxu0 0.0
        %710 = vmatprep.subr.mxu0 0.0
        %711 = vmatpush2.msra.mxu0 0.0
        %712 = vmatprep.subr.mxu0 0.0
        %713 = vmatpush2.msra.mxu0 0.0
        %714 = vmatprep.subr.mxu0 0.0
        %715 = vmatpush2.msra.mxu0 0.0
        %716 = vmatprep.subr.mxu0 0.0
        %717 = vmatpush2.msra.mxu0 0.0
        %718 = vmatprep.subr.mxu0 0.0
        %719 = vmatpush2.msra.mxu0 0.0
        %720 = vmatprep.subr.mxu0 0.0
        %721 = vmatpush2.msra.mxu0 0.0
        %722 = vmatprep.subr.mxu0 0.0
        %723 = vmatpush2.msra.mxu0 0.0
        %724 = vmatprep.subr.mxu0 0.0
        %725 = vmatpush2.msra.mxu0 0.0
        %726 = vmatprep.subr.mxu0 0.0
        %727 = vmatpush2.msra.mxu0 0.0
        %728 = vmatprep.subr.mxu0 0.0
        %729 = vmatpush2.msra.mxu0 0.0
        %730 = vmatprep.subr.mxu0 0.0
        %731 = vmatpush2.msra.mxu0 0.0
        %732 = vmatprep.subr.mxu0 0.0
        %733 = vmatpush2.msra.mxu0 0.0
        %734 = vmatprep.subr.mxu0 0.0
        %735 = vmatpush2.msra.mxu0 0.0
        %736 = vmatprep.subr.mxu0 0.0
        %737 = vmatpush2.msra.mxu0 0.0
        %738 = vmatprep.mubr.f32.mxu0 0.0
        %739 = vmatmul.mubr.f32.gmra.mxu0 %v672
        %v740 = vpop.f32.mrf.mxu0
        %v741 = vadd.f32 0.0, %v740
        %v742 = vpop.f32.mrf.mxu0
        %743 = vdwg.mxu0
        %v745 = vsel %vm342, %v741, 0
        %747 = vmatprep.subr.mxu0 0.0
        %748 = vmatpush1.msra.mxu0 0.0
        %749 = vmatprep.subr.mxu0 0.0
        %750 = vmatpush1.msra.mxu0 0.0
        %751 = vmatprep.subr.mxu0 0.0
        %752 = vmatpush1.msra.mxu0 0.0
        %753 = vmatprep.subr.mxu0 0.0
        %754 = vmatpush1.msra.mxu0 0.0
        %755 = vmatprep.subr.mxu0 0.0
        %756 = vmatpush1.msra.mxu0 0.0
        %757 = vmatprep.subr.mxu0 0.0
        %758 = vmatpush1.msra.mxu0 0.0
        %759 = vmatprep.subr.mxu0 0.0
        %760 = vmatpush1.msra.mxu0 0.0
        %761 = vmatprep.subr.mxu0 0.0
        %762 = vmatpush1.msra.mxu0 0.0
        %763 = vmatprep.subr.mxu0 0.0
        %764 = vmatpush1.msra.mxu0 0.0
        %765 = vmatprep.subr.mxu0 0.0
        %766 = vmatpush1.msra.mxu0 0.0
        %767 = vmatprep.subr.mxu0 0.0
        %768 = vmatpush1.msra.mxu0 0.0
        %769 = vmatprep.subr.mxu0 0.0
        %770 = vmatpush1.msra.mxu0 0.0
        %771 = vmatprep.subr.mxu0 0.0
        %772 = vmatpush1.msra.mxu0 0.0
        %773 = vmatprep.subr.mxu0 0.0
        %774 = vmatpush1.msra.mxu0 0.0
        %775 = vmatprep.subr.mxu0 0.0
        %776 = vmatpush1.msra.mxu0 0.0
        %777 = vmatprep.subr.mxu0 0.0
        %778 = vmatpush1.msra.mxu0 %v248
        %779 = vmatprep.subr.mxu0 0.0
        %780 = vmatpush2.msra.mxu0 0.0
        %781 = vmatprep.subr.mxu0 0.0
        %782 = vmatpush2.msra.mxu0 0.0
        %783 = vmatprep.subr.mxu0 0.0
        %784 = vmatpush2.msra.mxu0 0.0
        %785 = vmatprep.subr.mxu0 0.0
        %786 = vmatpush2.msra.mxu0 0.0
        %787 = vmatprep.subr.mxu0 0.0
        %788 = vmatpush2.msra.mxu0 0.0
        %789 = vmatprep.subr.mxu0 0.0
        %790 = vmatpush2.msra.mxu0 0.0
        %791 = vmatprep.subr.mxu0 0.0
        %792 = vmatpush2.msra.mxu0 0.0
        %793 = vmatprep.subr.mxu0 0.0
        %794 = vmatpush2.msra.mxu0 0.0
        %795 = vmatprep.subr.mxu0 0.0
        %796 = vmatpush2.msra.mxu0 0.0
        %797 = vmatprep.subr.mxu0 0.0
        %798 = vmatpush2.msra.mxu0 0.0
        %799 = vmatprep.subr.mxu0 0.0
        %800 = vmatpush2.msra.mxu0 0.0
        %801 = vmatprep.subr.mxu0 0.0
        %802 = vmatpush2.msra.mxu0 0.0
        %803 = vmatprep.subr.mxu0 0.0
        %804 = vmatpush2.msra.mxu0 0.0
        %805 = vmatprep.subr.mxu0 0.0
        %806 = vmatpush2.msra.mxu0 0.0
        %807 = vmatprep.subr.mxu0 0.0
        %808 = vmatpush2.msra.mxu0 0.0
        %809 = vmatprep.subr.mxu0 0.0
        %810 = vmatpush2.msra.mxu0 0.0
        %811 = vmatprep.mubr.f32.mxu0 0.0
        %812 = vmatmul.mubr.f32.gmra.mxu0 %v745
        %v813 = vpop.f32.mrf.mxu0
        %v814 = vadd.f32 0.0, %v813
        %v815 = vpop.f32.mrf.mxu0
        %816 = vdwg.mxu0
        %v817 = vadd.f32 %v578, %v814
        %818 = vrot.lane.b32.xlu0 %v338, 112
        %v819 = vpop.permute.xlu0 %818
        %820 = vrot.lane.b32.xlu0 %v322, 80
        %v821 = vpop.permute.xlu0 %820
        %v822 = vsel %vm342, %v819, 0
        %v824 = vsel %vm342, %v821, 0
        %826 = vmatprep.subr.mxu0 0.0
        %827 = vmatpush1.xpose.msra.mxu0 0.0
        %828 = vmatprep.subr.mxu0 0.0
        %829 = vmatpush1.xpose.msra.mxu0 0.0
        %830 = vmatprep.subr.mxu0 0.0
        %831 = vmatpush1.xpose.msra.mxu0 0.0
        %832 = vmatprep.subr.mxu0 0.0
        %833 = vmatpush1.xpose.msra.mxu0 0.0
        %834 = vmatprep.subr.mxu0 0.0
        %835 = vmatpush1.xpose.msra.mxu0 0.0
        %836 = vmatprep.subr.mxu0 0.0
        %837 = vmatpush1.xpose.msra.mxu0 0.0
        %838 = vmatprep.subr.mxu0 0.0
        %839 = vmatpush1.xpose.msra.mxu0 0.0
        %840 = vmatprep.subr.mxu0 0.0
        %841 = vmatpush1.xpose.msra.mxu0 0.0
        %842 = vmatprep.subr.mxu0 0.0
        %843 = vmatpush1.xpose.msra.mxu0 0.0
        %844 = vmatprep.subr.mxu0 0.0
        %845 = vmatpush1.xpose.msra.mxu0 0.0
        %846 = vmatprep.subr.mxu0 0.0
        %847 = vmatpush1.xpose.msra.mxu0 0.0
        %848 = vmatprep.subr.mxu0 0.0
        %849 = vmatpush1.xpose.msra.mxu0 0.0
        %850 = vmatprep.subr.mxu0 0.0
        %851 = vmatpush1.xpose.msra.mxu0 0.0
        %852 = vmatprep.subr.mxu0 0.0
        %853 = vmatpush1.xpose.msra.mxu0 0.0
        %854 = vmatprep.subr.mxu0 0.0
        %855 = vmatpush1.xpose.msra.mxu0 0.0
        %856 = vmatprep.subr.mxu0 0.0
        %857 = vmatpush1.xpose.msra.mxu0 %v824
        %858 = vmatprep.subr.mxu0 0.0
        %859 = vmatpush2.xpose.msra.mxu0 0.0
        %860 = vmatprep.subr.mxu0 0.0
        %861 = vmatpush2.xpose.msra.mxu0 0.0
        %862 = vmatprep.subr.mxu0 0.0
        %863 = vmatpush2.xpose.msra.mxu0 0.0
        %864 = vmatprep.subr.mxu0 0.0
        %865 = vmatpush2.xpose.msra.mxu0 0.0
        %866 = vmatprep.subr.mxu0 0.0
        %867 = vmatpush2.xpose.msra.mxu0 0.0
        %868 = vmatprep.subr.mxu0 0.0
        %869 = vmatpush2.xpose.msra.mxu0 0.0
        %870 = vmatprep.subr.mxu0 0.0
        %871 = vmatpush2.xpose.msra.mxu0 0.0
        %872 = vmatprep.subr.mxu0 0.0
        %873 = vmatpush2.xpose.msra.mxu0 0.0
        %874 = vmatprep.subr.mxu0 0.0
        %875 = vmatpush2.xpose.msra.mxu0 0.0
        %876 = vmatprep.subr.mxu0 0.0
        %877 = vmatpush2.xpose.msra.mxu0 0.0
        %878 = vmatprep.subr.mxu0 0.0
        %879 = vmatpush2.xpose.msra.mxu0 0.0
        %880 = vmatprep.subr.mxu0 0.0
        %881 = vmatpush2.xpose.msra.mxu0 0.0
        %882 = vmatprep.subr.mxu0 0.0
        %883 = vmatpush2.xpose.msra.mxu0 0.0
        %884 = vmatprep.subr.mxu0 0.0
        %885 = vmatpush2.xpose.msra.mxu0 0.0
        %886 = vmatprep.subr.mxu0 0.0
        %887 = vmatpush2.xpose.msra.mxu0 0.0
        %888 = vmatprep.subr.mxu0 0.0
        %889 = vmatpush2.xpose.msra.mxu0 0.0
        %890 = vmatprep.mubr.f32.mxu0 0.0
        %891 = vmatmul.mubr.f32.gmra.mxu0 %v822
        %v892 = vpop.f32.mrf.mxu0
        %v893 = vadd.f32 %v330, %v892
        %v894 = vpop.f32.mrf.mxu0
        %895 = vdwg.mxu0
        %v896 = vsel %vm342, %v893, -inf
        %897 = vmax.xlane.f32.xlu0 %v896
        %v898 = vpop.xlane.xlu0 %897
        %v899 = vsub.f32 %v893, %v898
        %v900 = vmul.f32 %v899, 1.442695
        %v901 = vpow.pop %v900
        %v902 = vsel %vm342, %v901, 0.0
        %903 = vadd.xlane.f32.xlu0 %v902
        %v904 = vpop.xlane.xlu0 %903
        %v905 = vrcp.pop %v904
        %v906 = vmul.f32 %v901, %v905
        %907 = vrot.lane.b32.xlu0 %v322, 48
        %v908 = vpop.permute.xlu0 %907
        %v911 = vsel %vm342, %v906, 0
        %913 = vmatprep.subr.mxu0 0.0
        %914 = vmatpush1.msra.mxu0 0.0
        %915 = vmatprep.subr.mxu0 0.0
        %916 = vmatpush1.msra.mxu0 0.0
        %917 = vmatprep.subr.mxu0 0.0
        %918 = vmatpush1.msra.mxu0 0.0
        %919 = vmatprep.subr.mxu0 0.0
        %920 = vmatpush1.msra.mxu0 0.0
        %921 = vmatprep.subr.mxu0 0.0
        %922 = vmatpush1.msra.mxu0 0.0
        %923 = vmatprep.subr.mxu0 0.0
        %924 = vmatpush1.msra.mxu0 0.0
        %925 = vmatprep.subr.mxu0 0.0
        %926 = vmatpush1.msra.mxu0 0.0
        %927 = vmatprep.subr.mxu0 0.0
        %928 = vmatpush1.msra.mxu0 0.0
        %929 = vmatprep.subr.mxu0 0.0
        %930 = vmatpush1.msra.mxu0 0.0
        %931 = vmatprep.subr.mxu0 0.0
        %932 = vmatpush1.msra.mxu0 0.0
        %933 = vmatprep.subr.mxu0 0.0
        %934 = vmatpush1.msra.mxu0 0.0
        %935 = vmatprep.subr.mxu0 0.0
        %936 = vmatpush1.msra.mxu0 0.0
        %937 = vmatprep.subr.mxu0 0.0
        %938 = vmatpush1.msra.mxu0 0.0
        %939 = vmatprep.subr.mxu0 0.0
        %940 = vmatpush1.msra.mxu0 0.0
        %941 = vmatprep.subr.mxu0 0.0
        %942 = vmatpush1.msra.mxu0 0.0
        %943 = vmatprep.subr.mxu0 0.0
        %944 = vmatpush1.msra.mxu0 %v908
        %945 = vmatprep.subr.mxu0 0.0
        %946 = vmatpush2.msra.mxu0 0.0
        %947 = vmatprep.subr.mxu0 0.0
        %948 = vmatpush2.msra.mxu0 0.0
        %949 = vmatprep.subr.mxu0 0.0
        %950 = vmatpush2.msra.mxu0 0.0
        %951 = vmatprep.subr.mxu0 0.0
        %952 = vmatpush2.msra.mxu0 0.0
        %953 = vmatprep.subr.mxu0 0.0
        %954 = vmatpush2.msra.mxu0 0.0
        %955 = vmatprep.subr.mxu0 0.0
        %956 = vmatpush2.msra.mxu0 0.0
        %957 = vmatprep.subr.mxu0 0.0
        %958 = vmatpush2.msra.mxu0 0.0
        %959 = vmatprep.subr.mxu0 0.0
        %960 = vmatpush2.msra.mxu0 0.0
        %961 = vmatprep.subr.mxu0 0.0
        %962 = vmatpush2.msra.mxu0 0.0
        %963 = vmatprep.subr.mxu0 0.0
        %964 = vmatpush2.msra.mxu0 0.0
        %965 = vmatprep.subr.mxu0 0.0
        %966 = vmatpush2.msra.mxu0 0.0
        %967 = vmatprep.subr.mxu0 0.0
        %968 = vmatpush2.msra.mxu0 0.0
        %969 = vmatprep.subr.mxu0 0.0
        %970 = vmatpush2.msra.mxu0 0.0
        %971 = vmatprep.subr.mxu0 0.0
        %972 = vmatpush2.msra.mxu0 0.0
        %973 = vmatprep.subr.mxu0 0.0
        %974 = vmatpush2.msra.mxu0 0.0
        %975 = vmatprep.subr.mxu0 0.0
        %976 = vmatpush2.msra.mxu0 0.0
        %977 = vmatprep.mubr.f32.mxu0 0.0
        %978 = vmatmul.mubr.f32.gmra.mxu0 %v911
        %v979 = vpop.f32.mrf.mxu0
        %v980 = vadd.f32 0.0, %v979
        %v981 = vpop.f32.mrf.mxu0
        %982 = vdwg.mxu0
        %v984 = vsel %vm342, %v980, 0
        %986 = vmatprep.subr.mxu0 0.0
        %987 = vmatpush1.msra.mxu0 0.0
        %988 = vmatprep.subr.mxu0 0.0
        %989 = vmatpush1.msra.mxu0 0.0
        %990 = vmatprep.subr.mxu0 0.0
        %991 = vmatpush1.msra.mxu0 0.0
        %992 = vmatprep.subr.mxu0 0.0
        %993 = vmatpush1.msra.mxu0 0.0
        %994 = vmatprep.subr.mxu0 0.0
        %995 = vmatpush1.msra.mxu0 0.0
        %996 = vmatprep.subr.mxu0 0.0
        %997 = vmatpush1.msra.mxu0 0.0
        %998 = vmatprep.subr.mxu0 0.0
        %999 = vmatpush1.msra.mxu0 0.0
        %1000 = vmatprep.subr.mxu0 0.0
        %1001 = vmatpush1.msra.mxu0 0.0
        %1002 = vmatprep.subr.mxu0 0.0
        %1003 = vmatpush1.msra.mxu0 0.0
        %1004 = vmatprep.subr.mxu0 0.0
        %1005 = vmatpush1.msra.mxu0 0.0
        %1006 = vmatprep.subr.mxu0 0.0
        %1007 = vmatpush1.msra.mxu0 0.0
        %1008 = vmatprep.subr.mxu0 0.0
        %1009 = vmatpush1.msra.mxu0 0.0
        %1010 = vmatprep.subr.mxu0 0.0
        %1011 = vmatpush1.msra.mxu0 0.0
        %1012 = vmatprep.subr.mxu0 0.0
        %1013 = vmatpush1.msra.mxu0 0.0
        %1014 = vmatprep.subr.mxu0 0.0
        %1015 = vmatpush1.msra.mxu0 0.0
        %1016 = vmatprep.subr.mxu0 0.0
        %1017 = vmatpush1.msra.mxu0 %v249
        %1018 = vmatprep.subr.mxu0 0.0
        %1019 = vmatpush2.msra.mxu0 0.0
        %1020 = vmatprep.subr.mxu0 0.0
        %1021 = vmatpush2.msra.mxu0 0.0
        %1022 = vmatprep.subr.mxu0 0.0
        %1023 = vmatpush2.msra.mxu0 0.0
        %1024 = vmatprep.subr.mxu0 0.0
        %1025 = vmatpush2.msra.mxu0 0.0
        %1026 = vmatprep.subr.mxu0 0.0
        %1027 = vmatpush2.msra.mxu0 0.0
        %1028 = vmatprep.subr.mxu0 0.0
        %1029 = vmatpush2.msra.mxu0 0.0
        %1030 = vmatprep.subr.mxu0 0.0
        %1031 = vmatpush2.msra.mxu0 0.0
        %1032 = vmatprep.subr.mxu0 0.0
        %1033 = vmatpush2.msra.mxu0 0.0
        %1034 = vmatprep.subr.mxu0 0.0
        %1035 = vmatpush2.msra.mxu0 0.0
        %1036 = vmatprep.subr.mxu0 0.0
        %1037 = vmatpush2.msra.mxu0 0.0
        %1038 = vmatprep.subr.mxu0 0.0
        %1039 = vmatpush2.msra.mxu0 0.0
        %1040 = vmatprep.subr.mxu0 0.0
        %1041 = vmatpush2.msra.mxu0 0.0
        %1042 = vmatprep.subr.mxu0 0.0
        %1043 = vmatpush2.msra.mxu0 0.0
        %1044 = vmatprep.subr.mxu0 0.0
        %1045 = vmatpush2.msra.mxu0 0.0
        %1046 = vmatprep.subr.mxu0 0.0
        %1047 = vmatpush2.msra.mxu0 0.0
        %1048 = vmatprep.subr.mxu0 0.0
        %1049 = vmatpush2.msra.mxu0 0.0
        %1050 = vmatprep.mubr.f32.mxu0 0.0
        %1051 = vmatmul.mubr.f32.gmra.mxu0 %v984
        %v1052 = vpop.f32.mrf.mxu0
        %v1053 = vadd.f32 0.0, %v1052
        %v1054 = vpop.f32.mrf.mxu0
        %1055 = vdwg.mxu0
        %v1056 = vadd.f32 %v817, %v1053
        %1057 = vrot.lane.b32.xlu0 %v338, 104
        %v1058 = vpop.permute.xlu0 %1057
        %1059 = vrot.lane.b32.xlu0 %v322, 72
        %v1060 = vpop.permute.xlu0 %1059
        %v1061 = vsel %vm342, %v1058, 0
        %v1063 = vsel %vm342, %v1060, 0
        %1065 = vmatprep.subr.mxu0 0.0
        %1066 = vmatpush1.xpose.msra.mxu0 0.0
        %1067 = vmatprep.subr.mxu0 0.0
        %1068 = vmatpush1.xpose.msra.mxu0 0.0
        %1069 = vmatprep.subr.mxu0 0.0
        %1070 = vmatpush1.xpose.msra.mxu0 0.0
        %1071 = vmatprep.subr.mxu0 0.0
        %1072 = vmatpush1.xpose.msra.mxu0 0.0
        %1073 = vmatprep.subr.mxu0 0.0
        %1074 = vmatpush1.xpose.msra.mxu0 0.0
        %1075 = vmatprep.subr.mxu0 0.0
        %1076 = vmatpush1.xpose.msra.mxu0 0.0
        %1077 = vmatprep.subr.mxu0 0.0
        %1078 = vmatpush1.xpose.msra.mxu0 0.0
        %1079 = vmatprep.subr.mxu0 0.0
        %1080 = vmatpush1.xpose.msra.mxu0 0.0
        %1081 = vmatprep.subr.mxu0 0.0
        %1082 = vmatpush1.xpose.msra.mxu0 0.0
        %1083 = vmatprep.subr.mxu0 0.0
        %1084 = vmatpush1.xpose.msra.mxu0 0.0
        %1085 = vmatprep.subr.mxu0 0.0
        %1086 = vmatpush1.xpose.msra.mxu0 0.0
        %1087 = vmatprep.subr.mxu0 0.0
        %1088 = vmatpush1.xpose.msra.mxu0 0.0
        %1089 = vmatprep.subr.mxu0 0.0
        %1090 = vmatpush1.xpose.msra.mxu0 0.0
        %1091 = vmatprep.subr.mxu0 0.0
        %1092 = vmatpush1.xpose.msra.mxu0 0.0
        %1093 = vmatprep.subr.mxu0 0.0
        %1094 = vmatpush1.xpose.msra.mxu0 0.0
        %1095 = vmatprep.subr.mxu0 0.0
        %1096 = vmatpush1.xpose.msra.mxu0 %v1063
        %1097 = vmatprep.subr.mxu0 0.0
        %1098 = vmatpush2.xpose.msra.mxu0 0.0
        %1099 = vmatprep.subr.mxu0 0.0
        %1100 = vmatpush2.xpose.msra.mxu0 0.0
        %1101 = vmatprep.subr.mxu0 0.0
        %1102 = vmatpush2.xpose.msra.mxu0 0.0
        %1103 = vmatprep.subr.mxu0 0.0
        %1104 = vmatpush2.xpose.msra.mxu0 0.0
        %1105 = vmatprep.subr.mxu0 0.0
        %1106 = vmatpush2.xpose.msra.mxu0 0.0
        %1107 = vmatprep.subr.mxu0 0.0
        %1108 = vmatpush2.xpose.msra.mxu0 0.0
        %1109 = vmatprep.subr.mxu0 0.0
        %1110 = vmatpush2.xpose.msra.mxu0 0.0
        %1111 = vmatprep.subr.mxu0 0.0
        %1112 = vmatpush2.xpose.msra.mxu0 0.0
        %1113 = vmatprep.subr.mxu0 0.0
        %1114 = vmatpush2.xpose.msra.mxu0 0.0
        %1115 = vmatprep.subr.mxu0 0.0
        %1116 = vmatpush2.xpose.msra.mxu0 0.0
        %1117 = vmatprep.subr.mxu0 0.0
        %1118 = vmatpush2.xpose.msra.mxu0 0.0
        %1119 = vmatprep.subr.mxu0 0.0
        %1120 = vmatpush2.xpose.msra.mxu0 0.0
        %1121 = vmatprep.subr.mxu0 0.0
        %1122 = vmatpush2.xpose.msra.mxu0 0.0
        %1123 = vmatprep.subr.mxu0 0.0
        %1124 = vmatpush2.xpose.msra.mxu0 0.0
        %1125 = vmatprep.subr.mxu0 0.0
        %1126 = vmatpush2.xpose.msra.mxu0 0.0
        %1127 = vmatprep.subr.mxu0 0.0
        %1128 = vmatpush2.xpose.msra.mxu0 0.0
        %1129 = vmatprep.mubr.f32.mxu0 0.0
        %1130 = vmatmul.mubr.f32.gmra.mxu0 %v1061
        %v1131 = vpop.f32.mrf.mxu0
        %v1132 = vadd.f32 %v330, %v1131
        %v1133 = vpop.f32.mrf.mxu0
        %1134 = vdwg.mxu0
        %v1135 = vsel %vm342, %v1132, -inf
        %1136 = vmax.xlane.f32.xlu0 %v1135
        %v1137 = vpop.xlane.xlu0 %1136
        %v1138 = vsub.f32 %v1132, %v1137
        %v1139 = vmul.f32 %v1138, 1.442695
        %v1140 = vpow.pop %v1139
        %v1141 = vsel %vm342, %v1140, 0.0
        %1142 = vadd.xlane.f32.xlu0 %v1141
        %v1143 = vpop.xlane.xlu0 %1142
        %v1144 = vrcp.pop %v1143
        %v1145 = vmul.f32 %v1140, %v1144
        %1146 = vrot.lane.b32.xlu0 %v322, 40
        %v1147 = vpop.permute.xlu0 %1146
        %v1150 = vsel %vm342, %v1145, 0
        %1152 = vmatprep.subr.mxu0 0.0
        %1153 = vmatpush1.msra.mxu0 0.0
        %1154 = vmatprep.subr.mxu0 0.0
        %1155 = vmatpush1.msra.mxu0 0.0
        %1156 = vmatprep.subr.mxu0 0.0
        %1157 = vmatpush1.msra.mxu0 0.0
        %1158 = vmatprep.subr.mxu0 0.0
        %1159 = vmatpush1.msra.mxu0 0.0
        %1160 = vmatprep.subr.mxu0 0.0
        %1161 = vmatpush1.msra.mxu0 0.0
        %1162 = vmatprep.subr.mxu0 0.0
        %1163 = vmatpush1.msra.mxu0 0.0
        %1164 = vmatprep.subr.mxu0 0.0
        %1165 = vmatpush1.msra.mxu0 0.0
        %1166 = vmatprep.subr.mxu0 0.0
        %1167 = vmatpush1.msra.mxu0 0.0
        %1168 = vmatprep.subr.mxu0 0.0
        %1169 = vmatpush1.msra.mxu0 0.0
        %1170 = vmatprep.subr.mxu0 0.0
        %1171 = vmatpush1.msra.mxu0 0.0
        %1172 = vmatprep.subr.mxu0 0.0
        %1173 = vmatpush1.msra.mxu0 0.0
        %1174 = vmatprep.subr.mxu0 0.0
        %1175 = vmatpush1.msra.mxu0 0.0
        %1176 = vmatprep.subr.mxu0 0.0
        %1177 = vmatpush1.msra.mxu0 0.0
        %1178 = vmatprep.subr.mxu0 0.0
        %1179 = vmatpush1.msra.mxu0 0.0
        %1180 = vmatprep.subr.mxu0 0.0
        %1181 = vmatpush1.msra.mxu0 0.0
        %1182 = vmatprep.subr.mxu0 0.0
        %1183 = vmatpush1.msra.mxu0 %v1147
        %1184 = vmatprep.subr.mxu0 0.0
        %1185 = vmatpush2.msra.mxu0 0.0
        %1186 = vmatprep.subr.mxu0 0.0
        %1187 = vmatpush2.msra.mxu0 0.0
        %1188 = vmatprep.subr.mxu0 0.0
        %1189 = vmatpush2.msra.mxu0 0.0
        %1190 = vmatprep.subr.mxu0 0.0
        %1191 = vmatpush2.msra.mxu0 0.0
        %1192 = vmatprep.subr.mxu0 0.0
        %1193 = vmatpush2.msra.mxu0 0.0
        %1194 = vmatprep.subr.mxu0 0.0
        %1195 = vmatpush2.msra.mxu0 0.0
        %1196 = vmatprep.subr.mxu0 0.0
        %1197 = vmatpush2.msra.mxu0 0.0
        %1198 = vmatprep.subr.mxu0 0.0
        %1199 = vmatpush2.msra.mxu0 0.0
        %1200 = vmatprep.subr.mxu0 0.0
        %1201 = vmatpush2.msra.mxu0 0.0
        %1202 = vmatprep.subr.mxu0 0.0
        %1203 = vmatpush2.msra.mxu0 0.0
        %1204 = vmatprep.subr.mxu0 0.0
        %1205 = vmatpush2.msra.mxu0 0.0
        %1206 = vmatprep.subr.mxu0 0.0
        %1207 = vmatpush2.msra.mxu0 0.0
        %1208 = vmatprep.subr.mxu0 0.0
        %1209 = vmatpush2.msra.mxu0 0.0
        %1210 = vmatprep.subr.mxu0 0.0
        %1211 = vmatpush2.msra.mxu0 0.0
        %1212 = vmatprep.subr.mxu0 0.0
        %1213 = vmatpush2.msra.mxu0 0.0
        %1214 = vmatprep.subr.mxu0 0.0
        %1215 = vmatpush2.msra.mxu0 0.0
        %1216 = vmatprep.mubr.f32.mxu0 0.0
        %1217 = vmatmul.mubr.f32.gmra.mxu0 %v1150
        %v1218 = vpop.f32.mrf.mxu0
        %v1219 = vadd.f32 0.0, %v1218
        %v1220 = vpop.f32.mrf.mxu0
        %1221 = vdwg.mxu0
        %v1223 = vsel %vm342, %v1219, 0
        %1225 = vmatprep.subr.mxu0 0.0
        %1226 = vmatpush1.msra.mxu0 0.0
        %1227 = vmatprep.subr.mxu0 0.0
        %1228 = vmatpush1.msra.mxu0 0.0
        %1229 = vmatprep.subr.mxu0 0.0
        %1230 = vmatpush1.msra.mxu0 0.0
        %1231 = vmatprep.subr.mxu0 0.0
        %1232 = vmatpush1.msra.mxu0 0.0
        %1233 = vmatprep.subr.mxu0 0.0
        %1234 = vmatpush1.msra.mxu0 0.0
        %1235 = vmatprep.subr.mxu0 0.0
        %1236 = vmatpush1.msra.mxu0 0.0
        %1237 = vmatprep.subr.mxu0 0.0
        %1238 = vmatpush1.msra.mxu0 0.0
        %1239 = vmatprep.subr.mxu0 0.0
        %1240 = vmatpush1.msra.mxu0 0.0
        %1241 = vmatprep.subr.mxu0 0.0
        %1242 = vmatpush1.msra.mxu0 0.0
        %1243 = vmatprep.subr.mxu0 0.0
        %1244 = vmatpush1.msra.mxu0 0.0
        %1245 = vmatprep.subr.mxu0 0.0
        %1246 = vmatpush1.msra.mxu0 0.0
        %1247 = vmatprep.subr.mxu0 0.0
        %1248 = vmatpush1.msra.mxu0 0.0
        %1249 = vmatprep.subr.mxu0 0.0
        %1250 = vmatpush1.msra.mxu0 0.0
        %1251 = vmatprep.subr.mxu0 0.0
        %1252 = vmatpush1.msra.mxu0 0.0
        %1253 = vmatprep.subr.mxu0 0.0
        %1254 = vmatpush1.msra.mxu0 0.0
        %1255 = vmatprep.subr.mxu0 0.0
        %1256 = vmatpush1.msra.mxu0 %v250
        %1257 = vmatprep.subr.mxu0 0.0
        %1258 = vmatpush2.msra.mxu0 0.0
        %1259 = vmatprep.subr.mxu0 0.0
        %1260 = vmatpush2.msra.mxu0 0.0
        %1261 = vmatprep.subr.mxu0 0.0
        %1262 = vmatpush2.msra.mxu0 0.0
        %1263 = vmatprep.subr.mxu0 0.0
        %1264 = vmatpush2.msra.mxu0 0.0
        %1265 = vmatprep.subr.mxu0 0.0
        %1266 = vmatpush2.msra.mxu0 0.0
        %1267 = vmatprep.subr.mxu0 0.0
        %1268 = vmatpush2.msra.mxu0 0.0
        %1269 = vmatprep.subr.mxu0 0.0
        %1270 = vmatpush2.msra.mxu0 0.0
        %1271 = vmatprep.subr.mxu0 0.0
        %1272 = vmatpush2.msra.mxu0 0.0
        %1273 = vmatprep.subr.mxu0 0.0
        %1274 = vmatpush2.msra.mxu0 0.0
        %1275 = vmatprep.subr.mxu0 0.0
        %1276 = vmatpush2.msra.mxu0 0.0
        %1277 = vmatprep.subr.mxu0 0.0
        %1278 = vmatpush2.msra.mxu0 0.0
        %1279 = vmatprep.subr.mxu0 0.0
        %1280 = vmatpush2.msra.mxu0 0.0
        %1281 = vmatprep.subr.mxu0 0.0
        %1282 = vmatpush2.msra.mxu0 0.0
        %1283 = vmatprep.subr.mxu0 0.0
        %1284 = vmatpush2.msra.mxu0 0.0
        %1285 = vmatprep.subr.mxu0 0.0
        %1286 = vmatpush2.msra.mxu0 0.0
        %1287 = vmatprep.subr.mxu0 0.0
        %1288 = vmatpush2.msra.mxu0 0.0
        %1289 = vmatprep.mubr.f32.mxu0 0.0
        %1290 = vmatmul.mubr.f32.gmra.mxu0 %v1223
        %v1291 = vpop.f32.mrf.mxu0
        %v1292 = vadd.f32 0.0, %v1291
        %v1293 = vpop.f32.mrf.mxu0
        %1294 = vdwg.mxu0
        %v1295 = vadd.f32 %v1056, %v1292
        %1296 = vst.msk [vmem:[%s241] sm:$0xff] %vm251, %v1295
        %s1297 = sand.u32 %s119, 1
        %s1298 = scalar_lea.sflag [#allocation4], %s1297
        %s1299 = sand.u32 %s119, 1
        %s1300 = smul.addr %s1299, 8
        %s1301 = scalar_lea.vmem [#allocation8], %s1300
        // Predicated region
        $region49: #{multi_head_attention.1} parent=35 // pred_check
          %p1302 = pneg %p129
        $region50: #{multi_head_attention.1} parent=35 // pred_check_branch
          %1304 = sbr.rel (%p1302) target = $region52
        $region51: #{multi_head_attention.1} parent=35 // pred_region
          %s1306 = ssub.s32 128, 128
          %1307 = vsyncadd %s1298, %s1306
          %s1308 = smul.addr %s22, 128
          %s1309 = scalar_lea.hbm %s4, %s1308
          %s1311 = sshll.u32 %s1301, 4
          %s1312 = int_to_ptr.vmem [resolvable:$true] %s1311
          %1314 = dma.vmem_to_hbm [thread:$0]  %s1312, 128, %s1309, %s1298
        $region52: #{multi_head_attention.1} parent=35 // pred_fallthru
          _
      $region36: #{multi_head_attention.1} parent=5 // pred_fallthru
        _
      %p1315 = scmp.le.s32.totalorder 2, %s17
      // Predicated region
      $region53: #{multi_head_attention.1} parent=5 // pred_check
        %p1316 = pneg %p1315
      $region54: #{multi_head_attention.1} parent=5 // pred_check_branch
        %1318 = sbr.rel (%p1316) target = $region56
      $region55: #{multi_head_attention.1} parent=5 // pred_region
        %s1319 = ssub.s32 %s17, 2
        // Predicated region
        $region57: #{multi_head_attention.1} parent=55 // pred_check
          %p1320 = pneg %p135
        $region58: #{multi_head_attention.1} parent=55 // pred_check_branch
          %1322 = sbr.rel (%p1320) target = $region60
        $region59: #{multi_head_attention.1} parent=55 // pred_region
          %s1323 = sand.u32 %s120, 1
          %s1324 = scalar_lea.sflag [#allocation4], %s1323
          %s1325 = sand.u32 %s120, 1
          %s1326 = smul.addr %s1325, 8
          %s1327 = scalar_lea.vmem [#allocation8], %s1326
          %1328 = dma.done %s1324, 128
        $region60: #{multi_head_attention.1} parent=55 // pred_fallthru
          _
      $region56: #{multi_head_attention.1} parent=5 // pred_fallthru
        _
    $region6: #{multi_head_attention.1} parent=1 // loop_footer
      %s21 = sadd.s32 1, %s17
    $region7: #{multi_head_attention.1} parent=1 // loop_footer_branch
      %16 = sbr.rel target = $region3
    $region8: #{multi_head_attention.1} parent=1 // loop_exit
      _
    %1329 = vsyncpa [#allocation3], 1
    %s1330 = scalar_lea.sflag [#allocation3], 1
    %1331 = vsyncpa %s1330, 1
    %1332 = vsyncpa [#allocation6], 1
    %1333 = vsyncpa [#allocation4], 1
    %s1334 = scalar_lea.sflag [#allocation4], 1
    %1335 = vsyncpa %s1334, 1

</llo_original>
